<compile_context>
chip_gen: v5e
topology: v5e:2x2
jax: 0.10.0
libtpu: 0.0.40
codegen_flags: <defaults>
</compile_context>

<pallas_src>
import functools

import jax
import jax.numpy as jnp
from jax.experimental import pallas as pl
from jax.experimental.pallas import tpu as pltpu

# ---- module hyper-parameters: AtomEmbedding(16, 1, 32, 16, vector_normalizer=20.0) ----
IN_SCALAR = 16
IN_VECTOR = 1
OUT_SCALAR = 32
OUT_VECTOR = 16
VECTOR_NORMALIZER = 20.0

SCALAR_FEAT_DIM = 20          # scalar_input carries extra features; forward uses [:, :in_scalar]
VEC_FLAT = 3 * OUT_VECTOR     # 48: flattened (out_vector, 3) in j-major (torch) element order

N_ATOMS = 2048                # demo batch: gives 2 row tiles -> exercises grid + megacore path


def atom_embedding_kernel(x_ref, v_ref, w1_ref, w2_ref, b1_ref, b2_ref,
                          sca_ref, vec_ref):
    # Scalar branch: (tile_n, F) @ (F, 32). Rows >= IN_SCALAR of w1 are zero, which absorbs
    # torch's scalar_input[:, :in_scalar] slice without any wrapper-side HBM copy.
    # NOTE(semantics): NaN/Inf in the discarded columns [IN_SCALAR:] would propagate here
    # (0 * Inf = NaN), unlike the torch slice which drops them. Fine for clean data.
    sca = jnp.dot(x_ref[...], w1_ref[...], preferred_element_type=jnp.float32)
    sca_ref[...] = (sca + b1_ref[...]).astype(sca_ref.dtype)

    # Vector branch: (tile_n, 3) @ (3, 48). The 1/vector_normalizer is folded into w2 and the
    # columns are interleaved (k = 3*j + c) so the flat output already has torch's
    # (out_vector, 3) element order -> only a free contiguous reshape in the wrapper.
    vec = jnp.dot(v_ref[...], w2_ref[...], preferred_element_type=jnp.float32)
    vec_ref[...] = (vec + b2_ref[...]).astype(vec_ref.dtype)


def init_params(key):
    """Deterministic synthetic parameters in the PyTorch Linear layout."""
    k1, k2, k3, k4 = jax.random.split(key, 4)
    w_sca = jax.random.normal(k1, (OUT_SCALAR, IN_SCALAR), jnp.float32) * 0.1   # Linear(16,32).weight
    b_sca = jax.random.normal(k2, (OUT_SCALAR,), jnp.float32) * 0.1             # Linear(16,32).bias
    w_vec = jax.random.normal(k3, (OUT_VECTOR, IN_VECTOR), jnp.float32) * 0.1   # Linear(1,16).weight
    b_vec = jax.random.normal(k4, (OUT_VECTOR,), jnp.float32) * 0.1             # Linear(1,16).bias
    return w_sca, b_sca, w_vec, b_vec


def fuse_params(params, scalar_feat_dim=SCALAR_FEAT_DIM):
    """Fold slice + normalizer + both Linear layers into two small weights and two bias rows.

    w1: (scalar_feat_dim, 32)  rows [IN_SCALAR:] zero, cols = w_sca.T
    w2: (3, 48)                w2[c, 3*j + c] = w_vec[j, 0] / normalizer  (torch element order)
    b1: (1, 32) = b_sca        b2: (1, 48) = repeat(b_vec, 3)
    """
    w_sca, b_sca, w_vec, b_vec = params

    w1 = jnp.zeros((scalar_feat_dim, OUT_SCALAR), jnp.float32)
    w1 = w1.at[:IN_SCALAR, :].set(w_sca.T)
    b1 = b_sca.reshape(1, OUT_SCALAR)

    wv = w_vec[:, 0] / VECTOR_NORMALIZER                      # (OUT_VECTOR,)
    w2 = jnp.zeros((3, VEC_FLAT), jnp.float32)
    for c in range(3):
        w2 = w2.at[c, c::3].set(wv)                           # column k = 3*j + c <- wv[j]
    b2 = jnp.repeat(b_vec, 3).reshape(1, VEC_FLAT)            # b2[0, 3*j + c] = b_vec[j]
    return w1, w2, b1, b2


def _round_up(x, m):
    return ((x + m - 1) // m) * m


def _pick_tile_n(n, requested):
    """Row-tile size: multiple of 8 (or == n); >=512 rows/tile to amortize ~0.35us/grid-step;
    >=2 tiles when n >= 1024 so both v7x TensorCores get work."""
    if n < 1024:
        return n                                             # one full-extent block
    t = min(requested, _round_up(pl.cdiv(n, 2), 8))          # prefer >= 2 row tiles
    t = max(512, t)
    return _round_up(t, 8)


@functools.partial(jax.jit, static_argnames=("tile_n", "out_dtype"))
def atom_embedding(scalar_input, vector_input, fused_params, *,
                   tile_n=4096, out_dtype=jnp.float32):
    """Returns (sca_emb (N, out_scalar), vec_emb (N, out_vector, 3)) exactly like PyTorch."""
    assert vector_input.shape[1:] == (3,), 'Not support. Only one vector can be input'
    w1, w2, b1, b2 = fused_params
    n, feat = scalar_input.shape
    assert feat == w1.shape[0]

    tile_n = _pick_tile_n(n, tile_n)
    grid = (pl.cdiv(n, tile_n),)

    bytes_out = jnp.dtype(out_dtype).itemsize
    cost = pl.CostEstimate(
        flops=2 * n * (feat * OUT_SCALAR + 3 * VEC_FLAT),
        transcendentals=0,
        bytes_accessed=n * (feat + 3) * 4 + n * (OUT_SCALAR + VEC_FLAT) * bytes_out,
    )

    sca_emb, vec_flat = pl.pallas_call(
        atom_embedding_kernel,
        out_shape=(
            jax.ShapeDtypeStruct((n, OUT_SCALAR), out_dtype),
            jax.ShapeDtypeStruct((n, VEC_FLAT), out_dtype),
        ),
        grid=grid,
        in_specs=[
            pl.BlockSpec((tile_n, feat), lambda i: (i, 0)),       # scalar_input (slice folded into w1)
            pl.BlockSpec((tile_n, 3), lambda i: (i, 0)),          # vector_input (/20 folded into w2)
            pl.BlockSpec((feat, OUT_SCALAR), lambda i: (0, 0)),   # fused scalar weight (VMEM-resident)
            pl.BlockSpec((3, VEC_FLAT), lambda i: (0, 0)),        # fused, interleaved vector weight
            pl.BlockSpec((1, OUT_SCALAR), lambda i: (0, 0)),      # scalar bias row
            pl.BlockSpec((1, VEC_FLAT), lambda i: (0, 0)),        # interleaved vector bias row
        ],
        out_specs=(
            pl.BlockSpec((tile_n, OUT_SCALAR), lambda i: (i, 0)),
            pl.BlockSpec((tile_n, VEC_FLAT), lambda i: (i, 0)),
        ),
        compiler_params=pltpu.CompilerParams(
            dimension_semantics=("parallel",)),                   # shard row tiles across TCs (v7x)
        cost_estimate=cost,
    )(scalar_input, vector_input, w1, w2, b1, b2)

    # Contiguous reshape only (no transpose, no slice): column k = 3*j + c already equals
    # torch's vec_emb[:, j, c].
    # TODO(synk): consumers that can take the flat (N, 48) (or coord-major) form should skip
    # this reshape — a last-dim-3 HBM array exists only to mirror torch's .transpose(1, -1).
    vec_emb = vec_flat.reshape(n, OUT_VECTOR, 3)
    return sca_emb, vec_emb


def reference(scalar_input, vector_input, params):
    """Pure-JAX reference mirroring the PyTorch forward (unfused params)."""
    w_sca, b_sca, w_vec, b_vec = params
    v = vector_input / VECTOR_NORMALIZER
    sca = scalar_input[:, :IN_SCALAR] @ w_sca.T + b_sca
    vec = v[:, :, None] * w_vec[None, None, :, 0] + b_vec[None, None, :]   # (N, 3, OUT_VECTOR)
    return sca, jnp.transpose(vec, (0, 2, 1))                              # (N, OUT_VECTOR, 3)


if __name__ == "__main__":
    key = jax.random.PRNGKey(0)
    kp, kx, kv = jax.random.split(key, 3)
    params = init_params(kp)
    fused = fuse_params(params)

    scalar_input = jax.random.normal(kx, (N_ATOMS, SCALAR_FEAT_DIM), jnp.float32)
    vector_input = jax.random.normal(kv, (N_ATOMS, 3), jnp.float32) * 5.0

    sca_emb, vec_emb = atom_embedding(scalar_input, vector_input, fused)
    (sca_emb, vec_emb) = jax.block_until_ready((sca_emb, vec_emb))

    ref_sca, ref_vec = reference(scalar_input, vector_input, params)
    assert sca_emb.shape == (N_ATOMS, OUT_SCALAR)
    assert vec_emb.shape == (N_ATOMS, OUT_VECTOR, 3)
    assert jnp.allclose(sca_emb, ref_sca, atol=1e-4, rtol=1e-4)
    assert jnp.allclose(vec_emb, ref_vec, atol=1e-4, rtol=1e-4)

    print("KERNEL_OK")
</pallas_src>

<mosaic_0001>
module attributes {stable_mosaic.version = 11 : i64} {
  func.func @atom_embedding_kernel(%arg0: i32, %arg1: memref<1024x20xf32, #tpu.memory_space<vmem>>, %arg2: memref<1024x3xf32, #tpu.memory_space<vmem>>, %arg3: memref<20x32xf32, #tpu.memory_space<vmem>>, %arg4: memref<3x48xf32, #tpu.memory_space<vmem>>, %arg5: memref<1x32xf32, #tpu.memory_space<vmem>>, %arg6: memref<1x48xf32, #tpu.memory_space<vmem>>, %arg7: memref<1024x32xf32, #tpu.memory_space<vmem>>, %arg8: memref<1024x48xf32, #tpu.memory_space<vmem>>) attributes {dimension_semantics = [#tpu.dimension_semantics<parallel>], iteration_bounds = array<i64: 2>, scalar_prefetch = 0 : i64, scratch_operands = 0 : i64, tpu.core_type = #tpu.core_type<tc>, window_params = [{transform_indices = @transform_0, window_bounds = array<i64: 1024, 20>}, {transform_indices = @transform_1, window_bounds = array<i64: 1024, 3>}, {pipeline_mode = #tpu.pipeline_mode<synchronous>, transform_indices = @transform_2, window_bounds = array<i64: 20, 32>}, {pipeline_mode = #tpu.pipeline_mode<synchronous>, transform_indices = @transform_3, window_bounds = array<i64: 3, 48>}, {pipeline_mode = #tpu.pipeline_mode<synchronous>, transform_indices = @transform_4, window_bounds = array<i64: 1, 32>}, {pipeline_mode = #tpu.pipeline_mode<synchronous>, transform_indices = @transform_5, window_bounds = array<i64: 1, 48>}, {transform_indices = @transform_6, window_bounds = array<i64: 1024, 32>}, {transform_indices = @transform_7, window_bounds = array<i64: 1024, 48>}]} {
    %c0 = arith.constant 0 : index
    %c0_0 = arith.constant 0 : index
    %0 = vector.load %arg1[%c0, %c0_0] : memref<1024x20xf32, #tpu.memory_space<vmem>>, vector<1024x20xf32>
    %c0_1 = arith.constant 0 : index
    %c0_2 = arith.constant 0 : index
    %1 = vector.load %arg3[%c0_1, %c0_2] : memref<20x32xf32, #tpu.memory_space<vmem>>, vector<20x32xf32>
    %cst = arith.constant dense<0.000000e+00> : vector<1024x32xf32>
    %2 = tpu.matmul %0, %1, %cst {dimension_numbers = #tpu.dot_dimension_numbers<[1], [0], [0], [1], [0, 0, 1, 1], [], []>} : vector<1024x20xf32>, vector<20x32xf32>, vector<1024x32xf32> -> vector<1024x32xf32>
    %c0_3 = arith.constant 0 : index
    %c0_4 = arith.constant 0 : index
    %3 = vector.load %arg5[%c0_3, %c0_4] : memref<1x32xf32, #tpu.memory_space<vmem>>, vector<1x32xf32>
    %4 = vector.broadcast %3 : vector<1x32xf32> to vector<1024x32xf32>
    %5 = arith.addf %2, %4 : vector<1024x32xf32>
    %c0_5 = arith.constant 0 : index
    %c0_6 = arith.constant 0 : index
    %6 = vector.load %arg7[%c0_5, %c0_6] : memref<1024x32xf32, #tpu.memory_space<vmem>>, vector<1024x32xf32>
    tpu.vector_store %arg7[%c0_5, %c0_6], %5 {strides = array<i32>} : memref<1024x32xf32, #tpu.memory_space<vmem>>, vector<1024x32xf32>,
    %c0_7 = arith.constant 0 : index
    %c0_8 = arith.constant 0 : index
    %7 = vector.load %arg2[%c0_7, %c0_8] : memref<1024x3xf32, #tpu.memory_space<vmem>>, vector<1024x3xf32>
    %c0_9 = arith.constant 0 : index
    %c0_10 = arith.constant 0 : index
    %8 = vector.load %arg4[%c0_9, %c0_10] : memref<3x48xf32, #tpu.memory_space<vmem>>, vector<3x48xf32>
    %cst_11 = arith.constant dense<0.000000e+00> : vector<1024x48xf32>
    %9 = tpu.matmul %7, %8, %cst_11 {dimension_numbers = #tpu.dot_dimension_numbers<[1], [0], [0], [1], [0, 0, 1, 1], [], []>} : vector<1024x3xf32>, vector<3x48xf32>, vector<1024x48xf32> -> vector<1024x48xf32>
    %c0_12 = arith.constant 0 : index
    %c0_13 = arith.constant 0 : index
    %10 = vector.load %arg6[%c0_12, %c0_13] : memref<1x48xf32, #tpu.memory_space<vmem>>, vector<1x48xf32>
    %11 = vector.broadcast %10 : vector<1x48xf32> to vector<1024x48xf32>
    %12 = arith.addf %9, %11 : vector<1024x48xf32>
    %c0_14 = arith.constant 0 : index
    %c0_15 = arith.constant 0 : index
    %13 = vector.load %arg8[%c0_14, %c0_15] : memref<1024x48xf32, #tpu.memory_space<vmem>>, vector<1024x48xf32>
    tpu.vector_store %arg8[%c0_14, %c0_15], %12 {strides = array<i32>} : memref<1024x48xf32, #tpu.memory_space<vmem>>, vector<1024x48xf32>,
    return
  }
  func.func @transform_0(%arg0: i32) -> (i32, i32) {
    %c0_i32 = arith.constant 0 : i32
    %c0_i32_0 = arith.constant 0 : i32
    return %arg0, %c0_i32 : i32, i32
  }
  func.func @transform_1(%arg0: i32) -> (i32, i32) {
    %c0_i32 = arith.constant 0 : i32
    %c0_i32_0 = arith.constant 0 : i32
    return %arg0, %c0_i32 : i32, i32
  }
  func.func @transform_2(%arg0: i32) -> (i32, i32) {
    %c0_i32 = arith.constant 0 : i32
    %c0_i32_0 = arith.constant 0 : i32
    %c0_i32_1 = arith.constant 0 : i32
    return %c0_i32, %c0_i32_0 : i32, i32
  }
  func.func @transform_3(%arg0: i32) -> (i32, i32) {
    %c0_i32 = arith.constant 0 : i32
    %c0_i32_0 = arith.constant 0 : i32
    %c0_i32_1 = arith.constant 0 : i32
    return %c0_i32, %c0_i32_0 : i32, i32
  }
  func.func @transform_4(%arg0: i32) -> (i32, i32) {
    %c0_i32 = arith.constant 0 : i32
    %c0_i32_0 = arith.constant 0 : i32
    %c0_i32_1 = arith.constant 0 : i32
    return %c0_i32, %c0_i32_0 : i32, i32
  }
  func.func @transform_5(%arg0: i32) -> (i32, i32) {
    %c0_i32 = arith.constant 0 : i32
    %c0_i32_0 = arith.constant 0 : i32
    %c0_i32_1 = arith.constant 0 : i32
    return %c0_i32, %c0_i32_0 : i32, i32
  }
  func.func @transform_6(%arg0: i32) -> (i32, i32) {
    %c0_i32 = arith.constant 0 : i32
    %c0_i32_0 = arith.constant 0 : i32
    return %arg0, %c0_i32 : i32, i32
  }
  func.func @transform_7(%arg0: i32) -> (i32, i32) {
    %c0_i32 = arith.constant 0 : i32
    %c0_i32_0 = arith.constant 0 : i32
    return %arg0, %c0_i32 : i32, i32
  }
}

</mosaic_0001>

<llo_original>
// kernel: atom_embedding.1
$region0: #{atom_embedding.1}
  #allocation0 [shape = 'u32[]', space=smem, size = 0x4, offset = 0x4, fixed_abs, tag = 'smem constant byte address 0x4 - core index']
  #allocation1 [shape = 'u32[72,128]{1,0:T(1,128)}', space=vmem, size = 0x9000, scoped, tag = 'internal scratch']
  %s0 = inlined_call_operand.vmem [shape: f32[2048,20], index: 0, kind: input, shape index: {}]
  %s1 = inlined_call_operand.vmem [shape: f32[2048,3], index: 1, kind: input, shape index: {}]
  %s2 = inlined_call_operand.vmem [shape: f32[20,32], index: 2, kind: input, shape index: {}]
  %s3 = inlined_call_operand.vmem [shape: f32[3,48], index: 3, kind: input, shape index: {}]
  %s4 = inlined_call_operand.vmem [shape: f32[1,32], index: 4, kind: input, shape index: {}]
  %s5 = inlined_call_operand.vmem [shape: f32[1,48], index: 5, kind: input, shape index: {}]
  %s6 = inlined_call_operand.vmem [shape: f32[2048,32], index: 6, kind: output, shape index: {0}]
  %s7 = inlined_call_operand.vmem [shape: f32[2048,48], index: 7, kind: output, shape index: {1}]
  %8 = xla_tuple %s6, %s7
  %s9 = sld [smem:[#allocation0]]
  $region65: #{atom_embedding.1} parent=0
    _
  %s11 = ssub.s32 1, %s9
  %s12 = scalar_select 0, %s11, %s9
  loop: start=0, step=1, limit=4
  $region2: #{atom_embedding.1} parent=0 // loop_pre_header
    _
  $region3: #{atom_embedding.1} parent=0 // loop_header
    %s14 = sphi 0, %s18
    %p15 = scmp.ge.s32.totalorder %s14, 4
    %s24 = sphi 0, %s26
    %s27 = sphi 0, %s24
    %s28 = sphi 0, %s27
    %s44 = sphi 0, %s28
    %s50 = sphi 0, %s52
    %s53 = sphi 0, %s50
    %s54 = sphi 0, %s53
    %s70 = sphi 0, %s54
    %s74 = sphi 0, %s74
    %s76 = sphi 0, %s74
    %s77 = sphi 0, %s76
    %s91 = sphi 0, %s77
    %s95 = sphi 0, %s95
    %s97 = sphi 0, %s95
    %s98 = sphi 0, %s97
    %s112 = sphi 0, %s98
    %s116 = sphi 0, %s116
    %s118 = sphi 0, %s116
    %s119 = sphi 0, %s118
    %s133 = sphi 0, %s119
    %s137 = sphi 0, %s137
    %s139 = sphi 0, %s137
    %s140 = sphi 0, %s139
    %s154 = sphi 0, %s140
    %s160 = sphi 0, %s162
    %s163 = sphi 0, %s160
    %s164 = sphi 0, %s163
    %s180 = sphi 0, %s164
    %s186 = sphi 0, %s188
    %s189 = sphi 0, %s186
    %s190 = sphi 0, %s189
    %s206 = sphi 0, %s190
  $region4: #{atom_embedding.1} parent=0 // loop_header_branch
    %17 = sbr.rel (%p15) target = $region8
  $region5: #{atom_embedding.1} parent=0 // loop_body
    %s19 = ssub.s32 %s14, 1
    %s20 = ssub.s32 %s14, 2
    %s21 = sadd.s32 %s14, 1
    %s22 = ssub.s32 %s14, %s21
    %p23 = scmp.eq.s32.totalorder %s22, 0
    %s25 = sadd.s32 %s24, 1
    %s26 = scalar_select %p23, %s24, %s25
    %p29 = pneg %p23
    %p30 = scmp.eq.s32.totalorder %s14, 1
    %p31 = por %p29, %p30
    %p32 = scmp.ne.s32.totalorder %s24, %s27
    %p33 = scmp.eq.s32.totalorder %s14, 0
    %p34 = por %p32, %p33
    %p35 = scmp.ne.s32.totalorder %s24, %s27
    %p36 = scmp.eq.s32.totalorder %s19, 1
    %p37 = por %p35, %p36
    %p38 = scmp.ne.s32.totalorder %s27, %s28
    %p39 = scmp.eq.s32.totalorder %s19, 0
    %p40 = por %p38, %p39
    %p41 = scmp.ne.s32.totalorder %s27, %s28
    %p42 = scmp.eq.s32.totalorder %s20, 1
    %p43 = por %p41, %p42
    %p45 = scmp.ne.s32.totalorder %s28, %s44
    %p46 = scmp.eq.s32.totalorder %s20, 0
    %p47 = por %p45, %p46
    %s48 = ssub.s32 %s14, %s21
    %p49 = scmp.eq.s32.totalorder %s48, 0
    %s51 = sadd.s32 %s50, 1
    %s52 = scalar_select %p49, %s50, %s51
    %p55 = pneg %p49
    %p56 = scmp.eq.s32.totalorder %s14, 1
    %p57 = por %p55, %p56
    %p58 = scmp.ne.s32.totalorder %s50, %s53
    %p59 = scmp.eq.s32.totalorder %s14, 0
    %p60 = por %p58, %p59
    %p61 = scmp.ne.s32.totalorder %s50, %s53
    %p62 = scmp.eq.s32.totalorder %s19, 1
    %p63 = por %p61, %p62
    %p64 = scmp.ne.s32.totalorder %s53, %s54
    %p65 = scmp.eq.s32.totalorder %s19, 0
    %p66 = por %p64, %p65
    %p67 = scmp.ne.s32.totalorder %s53, %s54
    %p68 = scmp.eq.s32.totalorder %s20, 1
    %p69 = por %p67, %p68
    %p71 = scmp.ne.s32.totalorder %s54, %s70
    %p72 = scmp.eq.s32.totalorder %s20, 0
    %p73 = por %p71, %p72
    %s75 = sadd.s32 %s74, 1
    %p78 = scmp.eq.s32.totalorder %s14, 1
    %p79 = scmp.ne.s32.totalorder %s74, %s76
    %p80 = scmp.eq.s32.totalorder %s14, 0
    %p81 = por %p79, %p80
    %p82 = scmp.ne.s32.totalorder %s74, %s76
    %p83 = scmp.eq.s32.totalorder %s19, 1
    %p84 = por %p82, %p83
    %p85 = scmp.ne.s32.totalorder %s76, %s77
    %p86 = scmp.eq.s32.totalorder %s19, 0
    %p87 = por %p85, %p86
    %p88 = scmp.ne.s32.totalorder %s76, %s77
    %p89 = scmp.eq.s32.totalorder %s20, 1
    %p90 = por %p88, %p89
    %p92 = scmp.ne.s32.totalorder %s77, %s91
    %p93 = scmp.eq.s32.totalorder %s20, 0
    %p94 = por %p92, %p93
    %s96 = sadd.s32 %s95, 1
    %p99 = scmp.eq.s32.totalorder %s14, 1
    %p100 = scmp.ne.s32.totalorder %s95, %s97
    %p101 = scmp.eq.s32.totalorder %s14, 0
    %p102 = por %p100, %p101
    %p103 = scmp.ne.s32.totalorder %s95, %s97
    %p104 = scmp.eq.s32.totalorder %s19, 1
    %p105 = por %p103, %p104
    %p106 = scmp.ne.s32.totalorder %s97, %s98
    %p107 = scmp.eq.s32.totalorder %s19, 0
    %p108 = por %p106, %p107
    %p109 = scmp.ne.s32.totalorder %s97, %s98
    %p110 = scmp.eq.s32.totalorder %s20, 1
    %p111 = por %p109, %p110
    %p113 = scmp.ne.s32.totalorder %s98, %s112
    %p114 = scmp.eq.s32.totalorder %s20, 0
    %p115 = por %p113, %p114
    %s117 = sadd.s32 %s116, 1
    %p120 = scmp.eq.s32.totalorder %s14, 1
    %p121 = scmp.ne.s32.totalorder %s116, %s118
    %p122 = scmp.eq.s32.totalorder %s14, 0
    %p123 = por %p121, %p122
    %p124 = scmp.ne.s32.totalorder %s116, %s118
    %p125 = scmp.eq.s32.totalorder %s19, 1
    %p126 = por %p124, %p125
    %p127 = scmp.ne.s32.totalorder %s118, %s119
    %p128 = scmp.eq.s32.totalorder %s19, 0
    %p129 = por %p127, %p128
    %p130 = scmp.ne.s32.totalorder %s118, %s119
    %p131 = scmp.eq.s32.totalorder %s20, 1
    %p132 = por %p130, %p131
    %p134 = scmp.ne.s32.totalorder %s119, %s133
    %p135 = scmp.eq.s32.totalorder %s20, 0
    %p136 = por %p134, %p135
    %s138 = sadd.s32 %s137, 1
    %p141 = scmp.eq.s32.totalorder %s14, 1
    %p142 = scmp.ne.s32.totalorder %s137, %s139
    %p143 = scmp.eq.s32.totalorder %s14, 0
    %p144 = por %p142, %p143
    %p145 = scmp.ne.s32.totalorder %s137, %s139
    %p146 = scmp.eq.s32.totalorder %s19, 1
    %p147 = por %p145, %p146
    %p148 = scmp.ne.s32.totalorder %s139, %s140
    %p149 = scmp.eq.s32.totalorder %s19, 0
    %p150 = por %p148, %p149
    %p151 = scmp.ne.s32.totalorder %s139, %s140
    %p152 = scmp.eq.s32.totalorder %s20, 1
    %p153 = por %p151, %p152
    %p155 = scmp.ne.s32.totalorder %s140, %s154
    %p156 = scmp.eq.s32.totalorder %s20, 0
    %p157 = por %p155, %p156
    %s158 = ssub.s32 %s14, %s21
    %p159 = scmp.eq.s32.totalorder %s158, 0
    %s161 = sadd.s32 %s160, 1
    %s162 = scalar_select %p159, %s160, %s161
    %p165 = pneg %p159
    %p166 = scmp.eq.s32.totalorder %s14, 1
    %p167 = por %p165, %p166
    %p168 = scmp.ne.s32.totalorder %s160, %s163
    %p169 = scmp.eq.s32.totalorder %s14, 0
    %p170 = por %p168, %p169
    %p171 = scmp.ne.s32.totalorder %s160, %s163
    %p172 = scmp.eq.s32.totalorder %s19, 1
    %p173 = por %p171, %p172
    %p174 = scmp.ne.s32.totalorder %s163, %s164
    %p175 = scmp.eq.s32.totalorder %s19, 0
    %p176 = por %p174, %p175
    %p177 = scmp.ne.s32.totalorder %s163, %s164
    %p178 = scmp.eq.s32.totalorder %s20, 1
    %p179 = por %p177, %p178
    %p181 = scmp.ne.s32.totalorder %s164, %s180
    %p182 = scmp.eq.s32.totalorder %s20, 0
    %p183 = por %p181, %p182
    %s184 = ssub.s32 %s14, %s21
    %p185 = scmp.eq.s32.totalorder %s184, 0
    %s187 = sadd.s32 %s186, 1
    %s188 = scalar_select %p185, %s186, %s187
    %p191 = pneg %p185
    %p192 = scmp.eq.s32.totalorder %s14, 1
    %p193 = por %p191, %p192
    %p194 = scmp.ne.s32.totalorder %s186, %s189
    %p195 = scmp.eq.s32.totalorder %s14, 0
    %p196 = por %p194, %p195
    %p197 = scmp.ne.s32.totalorder %s186, %s189
    %p198 = scmp.eq.s32.totalorder %s19, 1
    %p199 = por %p197, %p198
    %p200 = scmp.ne.s32.totalorder %s189, %s190
    %p201 = scmp.eq.s32.totalorder %s19, 0
    %p202 = por %p200, %p201
    %p203 = scmp.ne.s32.totalorder %s189, %s190
    %p204 = scmp.eq.s32.totalorder %s20, 1
    %p205 = por %p203, %p204
    %p207 = scmp.ne.s32.totalorder %s190, %s206
    %p208 = scmp.eq.s32.totalorder %s20, 0
    %p209 = por %p207, %p208
    %p210 = scmp.le.s32.totalorder 1, %s14
    %p211 = scmp.lt.s32.totalorder %s14, 3
    %p212 = pnand %p210, %p211
    %p213 = pneg %p212
    // Predicated region
    $region9: #{atom_embedding.1} parent=5 // pred_check
      _
    $region10: #{atom_embedding.1} parent=5 // pred_check_branch
      %215 = sbr.rel (%p212) target = $region12
    $region11: #{atom_embedding.1} parent=5 // pred_region
      %s216 = ssub.s32 %s14, 1
      // Predicated region
      $region13: #{atom_embedding.1} parent=11 // pred_check
        %p217 = pneg %p87
      $region14: #{atom_embedding.1} parent=11 // pred_check_branch
        %219 = sbr.rel (%p217) target = $region16
      $region15: #{atom_embedding.1} parent=11 // pred_region
        _
      $region16: #{atom_embedding.1} parent=11 // pred_fallthru
        _
      // Predicated region
      $region17: #{atom_embedding.1} parent=11 // pred_check
        %p220 = pneg %p108
      $region18: #{atom_embedding.1} parent=11 // pred_check_branch
        %222 = sbr.rel (%p220) target = $region20
      $region19: #{atom_embedding.1} parent=11 // pred_region
        _
      $region20: #{atom_embedding.1} parent=11 // pred_fallthru
        _
      // Predicated region
      $region21: #{atom_embedding.1} parent=11 // pred_check
        %p223 = pneg %p129
      $region22: #{atom_embedding.1} parent=11 // pred_check_branch
        %225 = sbr.rel (%p223) target = $region24
      $region23: #{atom_embedding.1} parent=11 // pred_region
        _
      $region24: #{atom_embedding.1} parent=11 // pred_fallthru
        _
      // Predicated region
      $region25: #{atom_embedding.1} parent=11 // pred_check
        %p226 = pneg %p150
      $region26: #{atom_embedding.1} parent=11 // pred_check_branch
        %228 = sbr.rel (%p226) target = $region28
      $region27: #{atom_embedding.1} parent=11 // pred_region
        _
      $region28: #{atom_embedding.1} parent=11 // pred_fallthru
        _
    $region12: #{atom_embedding.1} parent=5 // pred_fallthru
      _
    %p229 = scmp.lt.s32.totalorder %s14, 2
    // Predicated region
    $region29: #{atom_embedding.1} parent=5 // pred_check
      %p230 = pneg %p229
    $region30: #{atom_embedding.1} parent=5 // pred_check_branch
      %232 = sbr.rel (%p230) target = $region32
    $region31: #{atom_embedding.1} parent=5 // pred_region
      // Predicated region
      $region33: #{atom_embedding.1} parent=31 // pred_check
        %p233 = pneg %p34
      $region34: #{atom_embedding.1} parent=31 // pred_check_branch
        %235 = sbr.rel (%p233) target = $region36
      $region35: #{atom_embedding.1} parent=31 // pred_region
        %s236 = smul.u32 128, %s14
        %p237 = scmp.lt.s32.totalorder %s236, 255
        %s238 = scalar_select %p237, %s236, 255
        %s239 = smul.addr %s238, 8
        %s240 = scalar_lea.vmem %s0, %s239
        %s241 = smul.u32 128, %s14
      $region36: #{atom_embedding.1} parent=31 // pred_fallthru
        _
      // Predicated region
      $region37: #{atom_embedding.1} parent=31 // pred_check
        %p242 = pneg %p60
      $region38: #{atom_embedding.1} parent=31 // pred_check_branch
        %244 = sbr.rel (%p242) target = $region40
      $region39: #{atom_embedding.1} parent=31 // pred_region
        %s245 = smul.u32 128, %s14
        %p246 = scmp.lt.s32.totalorder %s245, 255
        %s247 = scalar_select %p246, %s245, 255
        %s248 = smul.addr %s247, 8
        %s249 = scalar_lea.vmem %s1, %s248
        %s250 = smul.u32 128, %s14
      $region40: #{atom_embedding.1} parent=31 // pred_fallthru
        _
    $region32: #{atom_embedding.1} parent=5 // pred_fallthru
      _
    %p251 = scmp.le.s32.totalorder 1, %s14
    %p252 = scmp.lt.s32.totalorder %s14, 3
    %p253 = pnand %p251, %p252
    %p254 = pneg %p253
    // Predicated region
    $region41: #{atom_embedding.1} parent=5 // pred_check
      _
    $region42: #{atom_embedding.1} parent=5 // pred_check_branch
      %256 = sbr.rel (%p253) target = $region44
    $region43: #{atom_embedding.1} parent=5 // pred_region
      %s257 = ssub.s32 %s14, 1
      %s258 = smul.u32 128, %s19
      %p259 = scmp.lt.s32.totalorder %s258, 255
      %s260 = scalar_select %p259, %s258, 255
      %s261 = smul.addr %s260, 8
      %s262 = scalar_lea.vmem %s0, %s261
      %p263 = pneg %p40
      %p264 = pneg %p37
      %s265 = smul.u32 128, %s19
      %p266 = scmp.lt.s32.totalorder %s265, 255
      %s267 = scalar_select %p266, %s265, 255
      %s268 = smul.addr %s267, 8
      %s269 = scalar_lea.vmem %s1, %s268
      %p270 = pneg %p66
      %p271 = pneg %p63
      %p272 = pneg %p87
      %p273 = pneg %p84
      %p274 = pneg %p108
      %p275 = pneg %p105
      %p276 = pneg %p129
      %p277 = pneg %p126
      %p278 = pneg %p150
      %p279 = pneg %p147
      %p280 = pneg %p176
      %p281 = pneg %p173
      %s282 = smul.u32 128, %s19
      %p283 = scmp.lt.s32.totalorder %s282, 255
      %s284 = scalar_select %p283, %s282, 255
      %s285 = smul.addr %s284, 8
      %s286 = scalar_lea.vmem %s6, %s285
      %p287 = pneg %p202
      %p288 = pneg %p199
      %s289 = smul.u32 128, %s19
      %p290 = scmp.lt.s32.totalorder %s289, 255
      %s291 = scalar_select %p290, %s289, 255
      %s292 = smul.addr %s291, 8
      %s293 = scalar_lea.vmem %s7, %s292
      %s294 = smul.u32 128, %s19
      %p295 = scmp.lt.s32.totalorder %s294, 255
      %s296 = scalar_select %p295, %s294, 255
      %s297 = smul.addr %s296, 8
      %s298 = scalar_lea.vmem %s0, %s297
      %s299 = smul.u32 128, %s19
      %s300 = smul.u32 128, %s19
      %p301 = scmp.lt.s32.totalorder %s300, 255
      %s302 = scalar_select %p301, %s300, 255
      %s303 = smul.addr %s302, 8
      %s304 = scalar_lea.vmem %s1, %s303
      %s305 = smul.u32 128, %s19
      %s306 = smul.u32 128, %s19
      %p307 = scmp.lt.s32.totalorder %s306, 255
      %s308 = scalar_select %p307, %s306, 255
      %s309 = smul.addr %s308, 8
      %s310 = scalar_lea.vmem %s6, %s309
      %s311 = smul.u32 128, %s19
      %s312 = smul.u32 128, %s19
      %p313 = scmp.lt.s32.totalorder %s312, 255
      %s314 = scalar_select %p313, %s312, 255
      %s315 = smul.addr %s314, 8
      %s316 = scalar_lea.vmem %s7, %s315
      %s317 = smul.u32 128, %s19
      %v318 = vld [vmem:[%s298] sm:$0xff]
      %v319 = vld [vmem:[%s298 + $0x8] sm:$0xff]
      %v320 = vld [vmem:[%s298 + $0x10] sm:$0xff]
      %v321 = vld [vmem:[%s298 + $0x18] sm:$0xff]
      %v322 = vld [vmem:[%s298 + $0x20] sm:$0xff]
      %v323 = vld [vmem:[%s298 + $0x28] sm:$0xff]
      %v324 = vld [vmem:[%s298 + $0x30] sm:$0xff]
      %v325 = vld [vmem:[%s298 + $0x38] sm:$0xff]
      %v326 = vld [vmem:[%s298 + $0x40] sm:$0xff]
      %v327 = vld [vmem:[%s298 + $0x48] sm:$0xff]
      %v328 = vld [vmem:[%s298 + $0x50] sm:$0xff]
      %v329 = vld [vmem:[%s298 + $0x58] sm:$0xff]
      %v330 = vld [vmem:[%s298 + $0x60] sm:$0xff]
      %v331 = vld [vmem:[%s298 + $0x68] sm:$0xff]
      %v332 = vld [vmem:[%s298 + $0x70] sm:$0xff]
      %v333 = vld [vmem:[%s298 + $0x78] sm:$0xff]
      %v334 = vld [vmem:[%s298 + $0x80] sm:$0xff]
      %v335 = vld [vmem:[%s298 + $0x88] sm:$0xff]
      %v336 = vld [vmem:[%s298 + $0x90] sm:$0xff]
      %v337 = vld [vmem:[%s298 + $0x98] sm:$0xff]
      %v338 = vld [vmem:[%s298 + $0xa0] sm:$0xff]
      %v339 = vld [vmem:[%s298 + $0xa8] sm:$0xff]
      %v340 = vld [vmem:[%s298 + $0xb0] sm:$0xff]
      %v341 = vld [vmem:[%s298 + $0xb8] sm:$0xff]
      %v342 = vld [vmem:[%s298 + $0xc0] sm:$0xff]
      %v343 = vld [vmem:[%s298 + $0xc8] sm:$0xff]
      %v344 = vld [vmem:[%s298 + $0xd0] sm:$0xff]
      %v345 = vld [vmem:[%s298 + $0xd8] sm:$0xff]
      %v346 = vld [vmem:[%s298 + $0xe0] sm:$0xff]
      %v347 = vld [vmem:[%s298 + $0xe8] sm:$0xff]
      %v348 = vld [vmem:[%s298 + $0xf0] sm:$0xff]
      %v349 = vld [vmem:[%s298 + $0xf8] sm:$0xff]
      %v350 = vld [vmem:[%s298 + $0x100] sm:$0xff]
      %v351 = vld [vmem:[%s298 + $0x108] sm:$0xff]
      %v352 = vld [vmem:[%s298 + $0x110] sm:$0xff]
      %v353 = vld [vmem:[%s298 + $0x118] sm:$0xff]
      %v354 = vld [vmem:[%s298 + $0x120] sm:$0xff]
      %v355 = vld [vmem:[%s298 + $0x128] sm:$0xff]
      %v356 = vld [vmem:[%s298 + $0x130] sm:$0xff]
      %v357 = vld [vmem:[%s298 + $0x138] sm:$0xff]
      %v358 = vld [vmem:[%s298 + $0x140] sm:$0xff]
      %v359 = vld [vmem:[%s298 + $0x148] sm:$0xff]
      %v360 = vld [vmem:[%s298 + $0x150] sm:$0xff]
      %v361 = vld [vmem:[%s298 + $0x158] sm:$0xff]
      %v362 = vld [vmem:[%s298 + $0x160] sm:$0xff]
      %v363 = vld [vmem:[%s298 + $0x168] sm:$0xff]
      %v364 = vld [vmem:[%s298 + $0x170] sm:$0xff]
      %v365 = vld [vmem:[%s298 + $0x178] sm:$0xff]
      %v366 = vld [vmem:[%s298 + $0x180] sm:$0xff]
      %v367 = vld [vmem:[%s298 + $0x188] sm:$0xff]
      %v368 = vld [vmem:[%s298 + $0x190] sm:$0xff]
      %v369 = vld [vmem:[%s298 + $0x198] sm:$0xff]
      %v370 = vld [vmem:[%s298 + $0x1a0] sm:$0xff]
      %v371 = vld [vmem:[%s298 + $0x1a8] sm:$0xff]
      %v372 = vld [vmem:[%s298 + $0x1b0] sm:$0xff]
      %v373 = vld [vmem:[%s298 + $0x1b8] sm:$0xff]
      %v374 = vld [vmem:[%s298 + $0x1c0] sm:$0xff]
      %v375 = vld [vmem:[%s298 + $0x1c8] sm:$0xff]
      %v376 = vld [vmem:[%s298 + $0x1d0] sm:$0xff]
      %v377 = vld [vmem:[%s298 + $0x1d8] sm:$0xff]
      %v378 = vld [vmem:[%s298 + $0x1e0] sm:$0xff]
      %v379 = vld [vmem:[%s298 + $0x1e8] sm:$0xff]
      %v380 = vld [vmem:[%s298 + $0x1f0] sm:$0xff]
      %v381 = vld [vmem:[%s298 + $0x1f8] sm:$0xff]
      %v382 = vld [vmem:[%s298 + $0x200] sm:$0xff]
      %v383 = vld [vmem:[%s298 + $0x208] sm:$0xff]
      %v384 = vld [vmem:[%s298 + $0x210] sm:$0xff]
      %v385 = vld [vmem:[%s298 + $0x218] sm:$0xff]
      %v386 = vld [vmem:[%s298 + $0x220] sm:$0xff]
      %v387 = vld [vmem:[%s298 + $0x228] sm:$0xff]
      %v388 = vld [vmem:[%s298 + $0x230] sm:$0xff]
      %v389 = vld [vmem:[%s298 + $0x238] sm:$0xff]
      %v390 = vld [vmem:[%s298 + $0x240] sm:$0xff]
      %v391 = vld [vmem:[%s298 + $0x248] sm:$0xff]
      %v392 = vld [vmem:[%s298 + $0x250] sm:$0xff]
      %v393 = vld [vmem:[%s298 + $0x258] sm:$0xff]
      %v394 = vld [vmem:[%s298 + $0x260] sm:$0xff]
      %v395 = vld [vmem:[%s298 + $0x268] sm:$0xff]
      %v396 = vld [vmem:[%s298 + $0x270] sm:$0xff]
      %v397 = vld [vmem:[%s298 + $0x278] sm:$0xff]
      %v398 = vld [vmem:[%s298 + $0x280] sm:$0xff]
      %v399 = vld [vmem:[%s298 + $0x288] sm:$0xff]
      %v400 = vld [vmem:[%s298 + $0x290] sm:$0xff]
      %v401 = vld [vmem:[%s298 + $0x298] sm:$0xff]
      %v402 = vld [vmem:[%s298 + $0x2a0] sm:$0xff]
      %v403 = vld [vmem:[%s298 + $0x2a8] sm:$0xff]
      %v404 = vld [vmem:[%s298 + $0x2b0] sm:$0xff]
      %v405 = vld [vmem:[%s298 + $0x2b8] sm:$0xff]
      %v406 = vld [vmem:[%s298 + $0x2c0] sm:$0xff]
      %v407 = vld [vmem:[%s298 + $0x2c8] sm:$0xff]
      %v408 = vld [vmem:[%s298 + $0x2d0] sm:$0xff]
      %v409 = vld [vmem:[%s298 + $0x2d8] sm:$0xff]
      %v410 = vld [vmem:[%s298 + $0x2e0] sm:$0xff]
      %v411 = vld [vmem:[%s298 + $0x2e8] sm:$0xff]
      %v412 = vld [vmem:[%s298 + $0x2f0] sm:$0xff]
      %v413 = vld [vmem:[%s298 + $0x2f8] sm:$0xff]
      %v414 = vld [vmem:[%s298 + $0x300] sm:$0xff]
      %v415 = vld [vmem:[%s298 + $0x308] sm:$0xff]
      %v416 = vld [vmem:[%s298 + $0x310] sm:$0xff]
      %v417 = vld [vmem:[%s298 + $0x318] sm:$0xff]
      %v418 = vld [vmem:[%s298 + $0x320] sm:$0xff]
      %v419 = vld [vmem:[%s298 + $0x328] sm:$0xff]
      %v420 = vld [vmem:[%s298 + $0x330] sm:$0xff]
      %v421 = vld [vmem:[%s298 + $0x338] sm:$0xff]
      %v422 = vld [vmem:[%s298 + $0x340] sm:$0xff]
      %v423 = vld [vmem:[%s298 + $0x348] sm:$0xff]
      %v424 = vld [vmem:[%s298 + $0x350] sm:$0xff]
      %v425 = vld [vmem:[%s298 + $0x358] sm:$0xff]
      %v426 = vld [vmem:[%s298 + $0x360] sm:$0xff]
      %v427 = vld [vmem:[%s298 + $0x368] sm:$0xff]
      %v428 = vld [vmem:[%s298 + $0x370] sm:$0xff]
      %v429 = vld [vmem:[%s298 + $0x378] sm:$0xff]
      %v430 = vld [vmem:[%s298 + $0x380] sm:$0xff]
      %v431 = vld [vmem:[%s298 + $0x388] sm:$0xff]
      %v432 = vld [vmem:[%s298 + $0x390] sm:$0xff]
      %v433 = vld [vmem:[%s298 + $0x398] sm:$0xff]
      %v434 = vld [vmem:[%s298 + $0x3a0] sm:$0xff]
      %v435 = vld [vmem:[%s298 + $0x3a8] sm:$0xff]
      %v436 = vld [vmem:[%s298 + $0x3b0] sm:$0xff]
      %v437 = vld [vmem:[%s298 + $0x3b8] sm:$0xff]
      %v438 = vld [vmem:[%s298 + $0x3c0] sm:$0xff]
      %v439 = vld [vmem:[%s298 + $0x3c8] sm:$0xff]
      %v440 = vld [vmem:[%s298 + $0x3d0] sm:$0xff]
      %v441 = vld [vmem:[%s298 + $0x3d8] sm:$0xff]
      %v442 = vld [vmem:[%s298 + $0x3e0] sm:$0xff]
      %v443 = vld [vmem:[%s298 + $0x3e8] sm:$0xff]
      %v444 = vld [vmem:[%s298 + $0x3f0] sm:$0xff]
      %v445 = vld [vmem:[%s298 + $0x3f8] sm:$0xff]
      %v446 = vld [vmem:[%s2] sm:$0xff]
      %v447 = vld [vmem:[%s2 + $0x8] sm:$0xff]
      %v448 = vld [vmem:[%s2 + $0x10] sm:$0xf]
      %v449 = vld [vmem:[%s4] sm:$0x1]
      %v451 = vperm.slane %v449, 0
      %vm453 = vcmask 162816
      %v455 = vsel %vm453, %v318, 0
      %v458 = vsel %vm453, %v319, 0
      %v461 = vsel %vm453, %v320, 0
      %v464 = vsel %vm453, %v321, 0
      %v467 = vsel %vm453, %v322, 0
      %v470 = vsel %vm453, %v323, 0
      %v473 = vsel %vm453, %v324, 0
      %v476 = vsel %vm453, %v325, 0
      %v479 = vsel %vm453, %v326, 0
      %v482 = vsel %vm453, %v327, 0
      %v485 = vsel %vm453, %v328, 0
      %v488 = vsel %vm453, %v329, 0
      %v491 = vsel %vm453, %v330, 0
      %v494 = vsel %vm453, %v331, 0
      %v497 = vsel %vm453, %v332, 0
      %v500 = vsel %vm453, %v333, 0
      %v503 = vsel %vm453, %v334, 0
      %v506 = vsel %vm453, %v335, 0
      %v509 = vsel %vm453, %v336, 0
      %v512 = vsel %vm453, %v337, 0
      %v515 = vsel %vm453, %v338, 0
      %v518 = vsel %vm453, %v339, 0
      %v521 = vsel %vm453, %v340, 0
      %v524 = vsel %vm453, %v341, 0
      %v527 = vsel %vm453, %v342, 0
      %v530 = vsel %vm453, %v343, 0
      %v533 = vsel %vm453, %v344, 0
      %v536 = vsel %vm453, %v345, 0
      %v539 = vsel %vm453, %v346, 0
      %v542 = vsel %vm453, %v347, 0
      %v545 = vsel %vm453, %v348, 0
      %v548 = vsel %vm453, %v349, 0
      %v551 = vsel %vm453, %v350, 0
      %v554 = vsel %vm453, %v351, 0
      %v557 = vsel %vm453, %v352, 0
      %v560 = vsel %vm453, %v353, 0
      %v563 = vsel %vm453, %v354, 0
      %v566 = vsel %vm453, %v355, 0
      %v569 = vsel %vm453, %v356, 0
      %v572 = vsel %vm453, %v357, 0
      %v575 = vsel %vm453, %v358, 0
      %v578 = vsel %vm453, %v359, 0
      %v581 = vsel %vm453, %v360, 0
      %v584 = vsel %vm453, %v361, 0
      %v587 = vsel %vm453, %v362, 0
      %v590 = vsel %vm453, %v363, 0
      %v593 = vsel %vm453, %v364, 0
      %v596 = vsel %vm453, %v365, 0
      %v599 = vsel %vm453, %v366, 0
      %v602 = vsel %vm453, %v367, 0
      %v605 = vsel %vm453, %v368, 0
      %v608 = vsel %vm453, %v369, 0
      %v611 = vsel %vm453, %v370, 0
      %v614 = vsel %vm453, %v371, 0
      %v617 = vsel %vm453, %v372, 0
      %v620 = vsel %vm453, %v373, 0
      %v623 = vsel %vm453, %v374, 0
      %v626 = vsel %vm453, %v375, 0
      %v629 = vsel %vm453, %v376, 0
      %v632 = vsel %vm453, %v377, 0
      %v635 = vsel %vm453, %v378, 0
      %v638 = vsel %vm453, %v379, 0
      %v641 = vsel %vm453, %v380, 0
      %v644 = vsel %vm453, %v381, 0
      %v647 = vsel %vm453, %v382, 0
      %v650 = vsel %vm453, %v383, 0
      %v653 = vsel %vm453, %v384, 0
      %v656 = vsel %vm453, %v385, 0
      %v659 = vsel %vm453, %v386, 0
      %v662 = vsel %vm453, %v387, 0
      %v665 = vsel %vm453, %v388, 0
      %v668 = vsel %vm453, %v389, 0
      %v671 = vsel %vm453, %v390, 0
      %v674 = vsel %vm453, %v391, 0
      %v677 = vsel %vm453, %v392, 0
      %v680 = vsel %vm453, %v393, 0
      %v683 = vsel %vm453, %v394, 0
      %v686 = vsel %vm453, %v395, 0
      %v689 = vsel %vm453, %v396, 0
      %v692 = vsel %vm453, %v397, 0
      %v695 = vsel %vm453, %v398, 0
      %v698 = vsel %vm453, %v399, 0
      %v701 = vsel %vm453, %v400, 0
      %v704 = vsel %vm453, %v401, 0
      %v707 = vsel %vm453, %v402, 0
      %v710 = vsel %vm453, %v403, 0
      %v713 = vsel %vm453, %v404, 0
      %v716 = vsel %vm453, %v405, 0
      %v719 = vsel %vm453, %v406, 0
      %v722 = vsel %vm453, %v407, 0
      %v725 = vsel %vm453, %v408, 0
      %v728 = vsel %vm453, %v409, 0
      %v731 = vsel %vm453, %v410, 0
      %v734 = vsel %vm453, %v411, 0
      %v737 = vsel %vm453, %v412, 0
      %v740 = vsel %vm453, %v413, 0
      %v743 = vsel %vm453, %v414, 0
      %v746 = vsel %vm453, %v415, 0
      %v749 = vsel %vm453, %v416, 0
      %v752 = vsel %vm453, %v417, 0
      %v755 = vsel %vm453, %v418, 0
      %v758 = vsel %vm453, %v419, 0
      %v761 = vsel %vm453, %v420, 0
      %v764 = vsel %vm453, %v421, 0
      %v767 = vsel %vm453, %v422, 0
      %v770 = vsel %vm453, %v423, 0
      %v773 = vsel %vm453, %v424, 0
      %v776 = vsel %vm453, %v425, 0
      %v779 = vsel %vm453, %v426, 0
      %v782 = vsel %vm453, %v427, 0
      %v785 = vsel %vm453, %v428, 0
      %v788 = vsel %vm453, %v429, 0
      %v791 = vsel %vm453, %v430, 0
      %v794 = vsel %vm453, %v431, 0
      %v797 = vsel %vm453, %v432, 0
      %v800 = vsel %vm453, %v433, 0
      %v803 = vsel %vm453, %v434, 0
      %v806 = vsel %vm453, %v435, 0
      %v809 = vsel %vm453, %v436, 0
      %v812 = vsel %vm453, %v437, 0
      %v815 = vsel %vm453, %v438, 0
      %v818 = vsel %vm453, %v439, 0
      %v821 = vsel %vm453, %v440, 0
      %v824 = vsel %vm453, %v441, 0
      %v827 = vsel %vm453, %v442, 0
      %v830 = vsel %vm453, %v443, 0
      %v833 = vsel %vm453, %v444, 0
      %v836 = vsel %vm453, %v445, 0
      %vm838 = vcmask 1043456
      %v840 = vsel %vm838, %v448, 0
      %842 = vmatpush.msra.mxu0 0.0
      %843 = vmatpush.msra.mxu0 0.0
      %844 = vmatpush.msra.mxu0 0.0
      %845 = vmatpush.msra.mxu0 0.0
      %846 = vmatpush.msra.mxu0 0.0
      %847 = vmatpush.msra.mxu0 0.0
      %848 = vmatpush.msra.mxu0 0.0
      %849 = vmatpush.msra.mxu0 0.0
      %850 = vmatpush.msra.mxu0 0.0
      %851 = vmatpush.msra.mxu0 0.0
      %852 = vmatpush.msra.mxu0 0.0
      %853 = vmatpush.msra.mxu0 0.0
      %854 = vmatpush.msra.mxu0 0.0
      %855 = vmatpush.msra.mxu0 %v840
      %856 = vmatpush.msra.mxu0 %v447
      %857 = vmatpush.msra.mxu0 %v446
      %858 = vmatmul.f32.gmra.mxu0 %v455
      %v859 = vpop.f32.mrf.mxu0
      %v860 = vadd.f32 %v451, %v859
      %861 = vmatmul.f32.gmra.mxu0 %v458
      %v862 = vpop.f32.mrf.mxu0
      %v863 = vadd.f32 %v451, %v862
      %864 = vmatmul.f32.gmra.mxu0 %v461
      %v865 = vpop.f32.mrf.mxu0
      %v866 = vadd.f32 %v451, %v865
      %867 = vmatmul.f32.gmra.mxu0 %v464
      %v868 = vpop.f32.mrf.mxu0
      %v869 = vadd.f32 %v451, %v868
      %870 = vmatmul.f32.gmra.mxu0 %v467
      %v871 = vpop.f32.mrf.mxu0
      %v872 = vadd.f32 %v451, %v871
      %873 = vmatmul.f32.gmra.mxu0 %v470
      %v874 = vpop.f32.mrf.mxu0
      %v875 = vadd.f32 %v451, %v874
      %876 = vmatmul.f32.gmra.mxu0 %v473
      %v877 = vpop.f32.mrf.mxu0
      %v878 = vadd.f32 %v451, %v877
      %879 = vmatmul.f32.gmra.mxu0 %v476
      %v880 = vpop.f32.mrf.mxu0
      %v881 = vadd.f32 %v451, %v880
      %882 = vmatmul.f32.gmra.mxu0 %v479
      %v883 = vpop.f32.mrf.mxu0
      %v884 = vadd.f32 %v451, %v883
      %885 = vmatmul.f32.gmra.mxu0 %v482
      %v886 = vpop.f32.mrf.mxu0
      %v887 = vadd.f32 %v451, %v886
      %888 = vmatmul.f32.gmra.mxu0 %v485
      %v889 = vpop.f32.mrf.mxu0
      %v890 = vadd.f32 %v451, %v889
      %891 = vmatmul.f32.gmra.mxu0 %v488
      %v892 = vpop.f32.mrf.mxu0
      %v893 = vadd.f32 %v451, %v892
      %894 = vmatmul.f32.gmra.mxu0 %v491
      %v895 = vpop.f32.mrf.mxu0
      %v896 = vadd.f32 %v451, %v895
      %897 = vmatmul.f32.gmra.mxu0 %v494
      %v898 = vpop.f32.mrf.mxu0
      %v899 = vadd.f32 %v451, %v898
      %900 = vmatmul.f32.gmra.mxu0 %v497
      %v901 = vpop.f32.mrf.mxu0
      %v902 = vadd.f32 %v451, %v901
      %903 = vmatmul.f32.gmra.mxu0 %v500
      %v904 = vpop.f32.mrf.mxu0
      %v905 = vadd.f32 %v451, %v904
      %906 = vmatmul.f32.gmra.mxu0 %v503
      %v907 = vpop.f32.mrf.mxu0
      %v908 = vadd.f32 %v451, %v907
      %909 = vmatmul.f32.gmra.mxu0 %v506
      %v910 = vpop.f32.mrf.mxu0
      %v911 = vadd.f32 %v451, %v910
      %912 = vmatmul.f32.gmra.mxu0 %v509
      %v913 = vpop.f32.mrf.mxu0
      %v914 = vadd.f32 %v451, %v913
      %915 = vmatmul.f32.gmra.mxu0 %v512
      %v916 = vpop.f32.mrf.mxu0
      %v917 = vadd.f32 %v451, %v916
      %918 = vmatmul.f32.gmra.mxu0 %v515
      %v919 = vpop.f32.mrf.mxu0
      %v920 = vadd.f32 %v451, %v919
      %921 = vmatmul.f32.gmra.mxu0 %v518
      %v922 = vpop.f32.mrf.mxu0
      %v923 = vadd.f32 %v451, %v922
      %924 = vmatmul.f32.gmra.mxu0 %v521
      %v925 = vpop.f32.mrf.mxu0
      %v926 = vadd.f32 %v451, %v925
      %927 = vmatmul.f32.gmra.mxu0 %v524
      %v928 = vpop.f32.mrf.mxu0
      %v929 = vadd.f32 %v451, %v928
      %930 = vmatmul.f32.gmra.mxu0 %v527
      %v931 = vpop.f32.mrf.mxu0
      %v932 = vadd.f32 %v451, %v931
      %933 = vmatmul.f32.gmra.mxu0 %v530
      %v934 = vpop.f32.mrf.mxu0
      %v935 = vadd.f32 %v451, %v934
      %936 = vmatmul.f32.gmra.mxu0 %v533
      %v937 = vpop.f32.mrf.mxu0
      %v938 = vadd.f32 %v451, %v937
      %939 = vmatmul.f32.gmra.mxu0 %v536
      %v940 = vpop.f32.mrf.mxu0
      %v941 = vadd.f32 %v451, %v940
      %942 = vmatmul.f32.gmra.mxu0 %v539
      %v943 = vpop.f32.mrf.mxu0
      %v944 = vadd.f32 %v451, %v943
      %945 = vmatmul.f32.gmra.mxu0 %v542
      %v946 = vpop.f32.mrf.mxu0
      %v947 = vadd.f32 %v451, %v946
      %948 = vmatmul.f32.gmra.mxu0 %v545
      %v949 = vpop.f32.mrf.mxu0
      %v950 = vadd.f32 %v451, %v949
      %951 = vmatmul.f32.gmra.mxu0 %v548
      %v952 = vpop.f32.mrf.mxu0
      %v953 = vadd.f32 %v451, %v952
      %954 = vmatmul.f32.gmra.mxu0 %v551
      %v955 = vpop.f32.mrf.mxu0
      %v956 = vadd.f32 %v451, %v955
      %957 = vmatmul.f32.gmra.mxu0 %v554
      %v958 = vpop.f32.mrf.mxu0
      %v959 = vadd.f32 %v451, %v958
      %960 = vmatmul.f32.gmra.mxu0 %v557
      %v961 = vpop.f32.mrf.mxu0
      %v962 = vadd.f32 %v451, %v961
      %963 = vmatmul.f32.gmra.mxu0 %v560
      %v964 = vpop.f32.mrf.mxu0
      %v965 = vadd.f32 %v451, %v964
      %966 = vmatmul.f32.gmra.mxu0 %v563
      %v967 = vpop.f32.mrf.mxu0
      %v968 = vadd.f32 %v451, %v967
      %969 = vmatmul.f32.gmra.mxu0 %v566
      %v970 = vpop.f32.mrf.mxu0
      %v971 = vadd.f32 %v451, %v970
      %972 = vmatmul.f32.gmra.mxu0 %v569
      %v973 = vpop.f32.mrf.mxu0
      %v974 = vadd.f32 %v451, %v973
      %975 = vmatmul.f32.gmra.mxu0 %v572
      %v976 = vpop.f32.mrf.mxu0
      %v977 = vadd.f32 %v451, %v976
      %978 = vmatmul.f32.gmra.mxu0 %v575
      %v979 = vpop.f32.mrf.mxu0
      %v980 = vadd.f32 %v451, %v979
      %981 = vmatmul.f32.gmra.mxu0 %v578
      %v982 = vpop.f32.mrf.mxu0
      %v983 = vadd.f32 %v451, %v982
      %984 = vmatmul.f32.gmra.mxu0 %v581
      %v985 = vpop.f32.mrf.mxu0
      %v986 = vadd.f32 %v451, %v985
      %987 = vmatmul.f32.gmra.mxu0 %v584
      %v988 = vpop.f32.mrf.mxu0
      %v989 = vadd.f32 %v451, %v988
      %990 = vmatmul.f32.gmra.mxu0 %v587
      %v991 = vpop.f32.mrf.mxu0
      %v992 = vadd.f32 %v451, %v991
      %993 = vmatmul.f32.gmra.mxu0 %v590
      %v994 = vpop.f32.mrf.mxu0
      %v995 = vadd.f32 %v451, %v994
      %996 = vmatmul.f32.gmra.mxu0 %v593
      %v997 = vpop.f32.mrf.mxu0
      %v998 = vadd.f32 %v451, %v997
      %999 = vmatmul.f32.gmra.mxu0 %v596
      %v1000 = vpop.f32.mrf.mxu0
      %v1001 = vadd.f32 %v451, %v1000
      %1002 = vmatmul.f32.gmra.mxu0 %v599
      %v1003 = vpop.f32.mrf.mxu0
      %v1004 = vadd.f32 %v451, %v1003
      %1005 = vmatmul.f32.gmra.mxu0 %v602
      %v1006 = vpop.f32.mrf.mxu0
      %v1007 = vadd.f32 %v451, %v1006
      %1008 = vmatmul.f32.gmra.mxu0 %v605
      %v1009 = vpop.f32.mrf.mxu0
      %v1010 = vadd.f32 %v451, %v1009
      %1011 = vmatmul.f32.gmra.mxu0 %v608
      %v1012 = vpop.f32.mrf.mxu0
      %v1013 = vadd.f32 %v451, %v1012
      %1014 = vmatmul.f32.gmra.mxu0 %v611
      %v1015 = vpop.f32.mrf.mxu0
      %v1016 = vadd.f32 %v451, %v1015
      %1017 = vmatmul.f32.gmra.mxu0 %v614
      %v1018 = vpop.f32.mrf.mxu0
      %v1019 = vadd.f32 %v451, %v1018
      %1020 = vmatmul.f32.gmra.mxu0 %v617
      %v1021 = vpop.f32.mrf.mxu0
      %v1022 = vadd.f32 %v451, %v1021
      %1023 = vmatmul.f32.gmra.mxu0 %v620
      %v1024 = vpop.f32.mrf.mxu0
      %v1025 = vadd.f32 %v451, %v1024
      %1026 = vmatmul.f32.gmra.mxu0 %v623
      %v1027 = vpop.f32.mrf.mxu0
      %v1028 = vadd.f32 %v451, %v1027
      %1029 = vmatmul.f32.gmra.mxu0 %v626
      %v1030 = vpop.f32.mrf.mxu0
      %v1031 = vadd.f32 %v451, %v1030
      %1032 = vmatmul.f32.gmra.mxu0 %v629
      %v1033 = vpop.f32.mrf.mxu0
      %v1034 = vadd.f32 %v451, %v1033
      %1035 = vmatmul.f32.gmra.mxu0 %v632
      %v1036 = vpop.f32.mrf.mxu0
      %v1037 = vadd.f32 %v451, %v1036
      %1038 = vmatmul.f32.gmra.mxu0 %v635
      %v1039 = vpop.f32.mrf.mxu0
      %v1040 = vadd.f32 %v451, %v1039
      %1041 = vmatmul.f32.gmra.mxu0 %v638
      %v1042 = vpop.f32.mrf.mxu0
      %v1043 = vadd.f32 %v451, %v1042
      %1044 = vmatmul.f32.gmra.mxu0 %v641
      %v1045 = vpop.f32.mrf.mxu0
      %v1046 = vadd.f32 %v451, %v1045
      %1047 = vmatmul.f32.gmra.mxu0 %v644
      %v1048 = vpop.f32.mrf.mxu0
      %v1049 = vadd.f32 %v451, %v1048
      %1050 = vmatmul.f32.gmra.mxu0 %v647
      %v1051 = vpop.f32.mrf.mxu0
      %v1052 = vadd.f32 %v451, %v1051
      %1053 = vmatmul.f32.gmra.mxu0 %v650
      %v1054 = vpop.f32.mrf.mxu0
      %v1055 = vadd.f32 %v451, %v1054
      %1056 = vmatmul.f32.gmra.mxu0 %v653
      %v1057 = vpop.f32.mrf.mxu0
      %v1058 = vadd.f32 %v451, %v1057
      %1059 = vmatmul.f32.gmra.mxu0 %v656
      %v1060 = vpop.f32.mrf.mxu0
      %v1061 = vadd.f32 %v451, %v1060
      %1062 = vmatmul.f32.gmra.mxu0 %v659
      %v1063 = vpop.f32.mrf.mxu0
      %v1064 = vadd.f32 %v451, %v1063
      %1065 = vmatmul.f32.gmra.mxu0 %v662
      %v1066 = vpop.f32.mrf.mxu0
      %v1067 = vadd.f32 %v451, %v1066
      %1068 = vmatmul.f32.gmra.mxu0 %v665
      %v1069 = vpop.f32.mrf.mxu0
      %v1070 = vadd.f32 %v451, %v1069
      %1071 = vmatmul.f32.gmra.mxu0 %v668
      %v1072 = vpop.f32.mrf.mxu0
      %v1073 = vadd.f32 %v451, %v1072
      %1074 = vmatmul.f32.gmra.mxu0 %v671
      %v1075 = vpop.f32.mrf.mxu0
      %v1076 = vadd.f32 %v451, %v1075
      %1077 = vmatmul.f32.gmra.mxu0 %v674
      %v1078 = vpop.f32.mrf.mxu0
      %v1079 = vadd.f32 %v451, %v1078
      %1080 = vmatmul.f32.gmra.mxu0 %v677
      %v1081 = vpop.f32.mrf.mxu0
      %v1082 = vadd.f32 %v451, %v1081
      %1083 = vmatmul.f32.gmra.mxu0 %v680
      %v1084 = vpop.f32.mrf.mxu0
      %v1085 = vadd.f32 %v451, %v1084
      %1086 = vmatmul.f32.gmra.mxu0 %v683
      %v1087 = vpop.f32.mrf.mxu0
      %v1088 = vadd.f32 %v451, %v1087
      %1089 = vmatmul.f32.gmra.mxu0 %v686
      %v1090 = vpop.f32.mrf.mxu0
      %v1091 = vadd.f32 %v451, %v1090
      %1092 = vmatmul.f32.gmra.mxu0 %v689
      %v1093 = vpop.f32.mrf.mxu0
      %v1094 = vadd.f32 %v451, %v1093
      %1095 = vmatmul.f32.gmra.mxu0 %v692
      %v1096 = vpop.f32.mrf.mxu0
      %v1097 = vadd.f32 %v451, %v1096
      %1098 = vmatmul.f32.gmra.mxu0 %v695
      %v1099 = vpop.f32.mrf.mxu0
      %v1100 = vadd.f32 %v451, %v1099
      %1101 = vmatmul.f32.gmra.mxu0 %v698
      %v1102 = vpop.f32.mrf.mxu0
      %v1103 = vadd.f32 %v451, %v1102
      %1104 = vmatmul.f32.gmra.mxu0 %v701
      %v1105 = vpop.f32.mrf.mxu0
      %v1106 = vadd.f32 %v451, %v1105
      %1107 = vmatmul.f32.gmra.mxu0 %v704
      %v1108 = vpop.f32.mrf.mxu0
      %v1109 = vadd.f32 %v451, %v1108
      %1110 = vmatmul.f32.gmra.mxu0 %v707
      %v1111 = vpop.f32.mrf.mxu0
      %v1112 = vadd.f32 %v451, %v1111
      %1113 = vmatmul.f32.gmra.mxu0 %v710
      %v1114 = vpop.f32.mrf.mxu0
      %v1115 = vadd.f32 %v451, %v1114
      %1116 = vmatmul.f32.gmra.mxu0 %v713
      %v1117 = vpop.f32.mrf.mxu0
      %v1118 = vadd.f32 %v451, %v1117
      %1119 = vmatmul.f32.gmra.mxu0 %v716
      %v1120 = vpop.f32.mrf.mxu0
      %v1121 = vadd.f32 %v451, %v1120
      %1122 = vmatmul.f32.gmra.mxu0 %v719
      %v1123 = vpop.f32.mrf.mxu0
      %v1124 = vadd.f32 %v451, %v1123
      %1125 = vmatmul.f32.gmra.mxu0 %v722
      %v1126 = vpop.f32.mrf.mxu0
      %v1127 = vadd.f32 %v451, %v1126
      %1128 = vmatmul.f32.gmra.mxu0 %v725
      %v1129 = vpop.f32.mrf.mxu0
      %v1130 = vadd.f32 %v451, %v1129
      %1131 = vmatmul.f32.gmra.mxu0 %v728
      %v1132 = vpop.f32.mrf.mxu0
      %v1133 = vadd.f32 %v451, %v1132
      %1134 = vmatmul.f32.gmra.mxu0 %v731
      %v1135 = vpop.f32.mrf.mxu0
      %v1136 = vadd.f32 %v451, %v1135
      %1137 = vmatmul.f32.gmra.mxu0 %v734
      %v1138 = vpop.f32.mrf.mxu0
      %v1139 = vadd.f32 %v451, %v1138
      %1140 = vmatmul.f32.gmra.mxu0 %v737
      %v1141 = vpop.f32.mrf.mxu0
      %v1142 = vadd.f32 %v451, %v1141
      %1143 = vmatmul.f32.gmra.mxu0 %v740
      %v1144 = vpop.f32.mrf.mxu0
      %v1145 = vadd.f32 %v451, %v1144
      %1146 = vmatmul.f32.gmra.mxu0 %v743
      %v1147 = vpop.f32.mrf.mxu0
      %v1148 = vadd.f32 %v451, %v1147
      %1149 = vmatmul.f32.gmra.mxu0 %v746
      %v1150 = vpop.f32.mrf.mxu0
      %v1151 = vadd.f32 %v451, %v1150
      %1152 = vmatmul.f32.gmra.mxu0 %v749
      %v1153 = vpop.f32.mrf.mxu0
      %v1154 = vadd.f32 %v451, %v1153
      %1155 = vmatmul.f32.gmra.mxu0 %v752
      %v1156 = vpop.f32.mrf.mxu0
      %v1157 = vadd.f32 %v451, %v1156
      %1158 = vmatmul.f32.gmra.mxu0 %v755
      %v1159 = vpop.f32.mrf.mxu0
      %v1160 = vadd.f32 %v451, %v1159
      %1161 = vmatmul.f32.gmra.mxu0 %v758
      %v1162 = vpop.f32.mrf.mxu0
      %v1163 = vadd.f32 %v451, %v1162
      %1164 = vmatmul.f32.gmra.mxu0 %v761
      %v1165 = vpop.f32.mrf.mxu0
      %v1166 = vadd.f32 %v451, %v1165
      %1167 = vmatmul.f32.gmra.mxu0 %v764
      %v1168 = vpop.f32.mrf.mxu0
      %v1169 = vadd.f32 %v451, %v1168
      %1170 = vmatmul.f32.gmra.mxu0 %v767
      %v1171 = vpop.f32.mrf.mxu0
      %v1172 = vadd.f32 %v451, %v1171
      %1173 = vmatmul.f32.gmra.mxu0 %v770
      %v1174 = vpop.f32.mrf.mxu0
      %v1175 = vadd.f32 %v451, %v1174
      %1176 = vmatmul.f32.gmra.mxu0 %v773
      %v1177 = vpop.f32.mrf.mxu0
      %v1178 = vadd.f32 %v451, %v1177
      %1179 = vmatmul.f32.gmra.mxu0 %v776
      %v1180 = vpop.f32.mrf.mxu0
      %v1181 = vadd.f32 %v451, %v1180
      %1182 = vmatmul.f32.gmra.mxu0 %v779
      %v1183 = vpop.f32.mrf.mxu0
      %v1184 = vadd.f32 %v451, %v1183
      %1185 = vmatmul.f32.gmra.mxu0 %v782
      %v1186 = vpop.f32.mrf.mxu0
      %v1187 = vadd.f32 %v451, %v1186
      %1188 = vmatmul.f32.gmra.mxu0 %v785
      %v1189 = vpop.f32.mrf.mxu0
      %v1190 = vadd.f32 %v451, %v1189
      %1191 = vmatmul.f32.gmra.mxu0 %v788
      %v1192 = vpop.f32.mrf.mxu0
      %v1193 = vadd.f32 %v451, %v1192
      %1194 = vmatmul.f32.gmra.mxu0 %v791
      %v1195 = vpop.f32.mrf.mxu0
      %v1196 = vadd.f32 %v451, %v1195
      %1197 = vmatmul.f32.gmra.mxu0 %v794
      %v1198 = vpop.f32.mrf.mxu0
      %v1199 = vadd.f32 %v451, %v1198
      %1200 = vmatmul.f32.gmra.mxu0 %v797
      %v1201 = vpop.f32.mrf.mxu0
      %v1202 = vadd.f32 %v451, %v1201
      %1203 = vmatmul.f32.gmra.mxu0 %v800
      %v1204 = vpop.f32.mrf.mxu0
      %v1205 = vadd.f32 %v451, %v1204
      %1206 = vmatmul.f32.gmra.mxu0 %v803
      %v1207 = vpop.f32.mrf.mxu0
      %v1208 = vadd.f32 %v451, %v1207
      %1209 = vmatmul.f32.gmra.mxu0 %v806
      %v1210 = vpop.f32.mrf.mxu0
      %v1211 = vadd.f32 %v451, %v1210
      %1212 = vmatmul.f32.gmra.mxu0 %v809
      %v1213 = vpop.f32.mrf.mxu0
      %v1214 = vadd.f32 %v451, %v1213
      %1215 = vmatmul.f32.gmra.mxu0 %v812
      %v1216 = vpop.f32.mrf.mxu0
      %v1217 = vadd.f32 %v451, %v1216
      %1218 = vmatmul.f32.gmra.mxu0 %v815
      %v1219 = vpop.f32.mrf.mxu0
      %v1220 = vadd.f32 %v451, %v1219
      %1221 = vmatmul.f32.gmra.mxu0 %v818
      %v1222 = vpop.f32.mrf.mxu0
      %v1223 = vadd.f32 %v451, %v1222
      %1224 = vmatmul.f32.gmra.mxu0 %v821
      %v1225 = vpop.f32.mrf.mxu0
      %v1226 = vadd.f32 %v451, %v1225
      %1227 = vmatmul.f32.gmra.mxu0 %v824
      %v1228 = vpop.f32.mrf.mxu0
      %v1229 = vadd.f32 %v451, %v1228
      %1230 = vmatmul.f32.gmra.mxu0 %v827
      %v1231 = vpop.f32.mrf.mxu0
      %v1232 = vadd.f32 %v451, %v1231
      %1233 = vmatmul.f32.gmra.mxu0 %v830
      %v1234 = vpop.f32.mrf.mxu0
      %v1235 = vadd.f32 %v451, %v1234
      %1236 = vmatmul.f32.gmra.mxu0 %v833
      %v1237 = vpop.f32.mrf.mxu0
      %v1238 = vadd.f32 %v451, %v1237
      %1239 = vmatmul.f32.gmra.mxu0 %v836
      %v1240 = vpop.f32.mrf.mxu0
      %v1241 = vadd.f32 %v451, %v1240
      %1242 = vdwg.mxu0
      %vm1243 = vcmask 261120
      %1244 = vst.msk [vmem:[%s310] sm:$0xff] %vm1243, %v860
      %1245 = vst.msk [vmem:[%s310 + $0x8] sm:$0xff] %vm1243, %v863
      %1246 = vst.msk [vmem:[%s310 + $0x10] sm:$0xff] %vm1243, %v866
      %1247 = vst.msk [vmem:[%s310 + $0x18] sm:$0xff] %vm1243, %v869
      %1248 = vst.msk [vmem:[%s310 + $0x20] sm:$0xff] %vm1243, %v872
      %1249 = vst.msk [vmem:[%s310 + $0x28] sm:$0xff] %vm1243, %v875
      %1250 = vst.msk [vmem:[%s310 + $0x30] sm:$0xff] %vm1243, %v878
      %1251 = vst.msk [vmem:[%s310 + $0x38] sm:$0xff] %vm1243, %v881
      %1252 = vst.msk [vmem:[%s310 + $0x40] sm:$0xff] %vm1243, %v884
      %1253 = vst.msk [vmem:[%s310 + $0x48] sm:$0xff] %vm1243, %v887
      %1254 = vst.msk [vmem:[%s310 + $0x50] sm:$0xff] %vm1243, %v890
      %1255 = vst.msk [vmem:[%s310 + $0x58] sm:$0xff] %vm1243, %v893
      %1256 = vst.msk [vmem:[%s310 + $0x60] sm:$0xff] %vm1243, %v896
      %1257 = vst.msk [vmem:[%s310 + $0x68] sm:$0xff] %vm1243, %v899
      %1258 = vst.msk [vmem:[%s310 + $0x70] sm:$0xff] %vm1243, %v902
      %1259 = vst.msk [vmem:[%s310 + $0x78] sm:$0xff] %vm1243, %v905
      %1260 = vst.msk [vmem:[%s310 + $0x80] sm:$0xff] %vm1243, %v908
      %1261 = vst.msk [vmem:[%s310 + $0x88] sm:$0xff] %vm1243, %v911
      %1262 = vst.msk [vmem:[%s310 + $0x90] sm:$0xff] %vm1243, %v914
      %1263 = vst.msk [vmem:[%s310 + $0x98] sm:$0xff] %vm1243, %v917
      %1264 = vst.msk [vmem:[%s310 + $0xa0] sm:$0xff] %vm1243, %v920
      %1265 = vst.msk [vmem:[%s310 + $0xa8] sm:$0xff] %vm1243, %v923
      %1266 = vst.msk [vmem:[%s310 + $0xb0] sm:$0xff] %vm1243, %v926
      %1267 = vst.msk [vmem:[%s310 + $0xb8] sm:$0xff] %vm1243, %v929
      %1268 = vst.msk [vmem:[%s310 + $0xc0] sm:$0xff] %vm1243, %v932
      %1269 = vst.msk [vmem:[%s310 + $0xc8] sm:$0xff] %vm1243, %v935
      %1270 = vst.msk [vmem:[%s310 + $0xd0] sm:$0xff] %vm1243, %v938
      %1271 = vst.msk [vmem:[%s310 + $0xd8] sm:$0xff] %vm1243, %v941
      %1272 = vst.msk [vmem:[%s310 + $0xe0] sm:$0xff] %vm1243, %v944
      %1273 = vst.msk [vmem:[%s310 + $0xe8] sm:$0xff] %vm1243, %v947
      %1274 = vst.msk [vmem:[%s310 + $0xf0] sm:$0xff] %vm1243, %v950
      %1275 = vst.msk [vmem:[%s310 + $0xf8] sm:$0xff] %vm1243, %v953
      %1276 = vst.msk [vmem:[%s310 + $0x100] sm:$0xff] %vm1243, %v956
      %1277 = vst.msk [vmem:[%s310 + $0x108] sm:$0xff] %vm1243, %v959
      %1278 = vst.msk [vmem:[%s310 + $0x110] sm:$0xff] %vm1243, %v962
      %1279 = vst.msk [vmem:[%s310 + $0x118] sm:$0xff] %vm1243, %v965
      %1280 = vst.msk [vmem:[%s310 + $0x120] sm:$0xff] %vm1243, %v968
      %1281 = vst.msk [vmem:[%s310 + $0x128] sm:$0xff] %vm1243, %v971
      %1282 = vst.msk [vmem:[%s310 + $0x130] sm:$0xff] %vm1243, %v974
      %1283 = vst.msk [vmem:[%s310 + $0x138] sm:$0xff] %vm1243, %v977
      %1284 = vst.msk [vmem:[%s310 + $0x140] sm:$0xff] %vm1243, %v980
      %1285 = vst.msk [vmem:[%s310 + $0x148] sm:$0xff] %vm1243, %v983
      %1286 = vst.msk [vmem:[%s310 + $0x150] sm:$0xff] %vm1243, %v986
      %1287 = vst.msk [vmem:[%s310 + $0x158] sm:$0xff] %vm1243, %v989
      %1288 = vst.msk [vmem:[%s310 + $0x160] sm:$0xff] %vm1243, %v992
      %1289 = vst.msk [vmem:[%s310 + $0x168] sm:$0xff] %vm1243, %v995
      %1290 = vst.msk [vmem:[%s310 + $0x170] sm:$0xff] %vm1243, %v998
      %1291 = vst.msk [vmem:[%s310 + $0x178] sm:$0xff] %vm1243, %v1001
      %1292 = vst.msk [vmem:[%s310 + $0x180] sm:$0xff] %vm1243, %v1004
      %1293 = vst.msk [vmem:[%s310 + $0x188] sm:$0xff] %vm1243, %v1007
      %1294 = vst.msk [vmem:[%s310 + $0x190] sm:$0xff] %vm1243, %v1010
      %1295 = vst.msk [vmem:[%s310 + $0x198] sm:$0xff] %vm1243, %v1013
      %1296 = vst.msk [vmem:[%s310 + $0x1a0] sm:$0xff] %vm1243, %v1016
      %1297 = vst.msk [vmem:[%s310 + $0x1a8] sm:$0xff] %vm1243, %v1019
      %1298 = vst.msk [vmem:[%s310 + $0x1b0] sm:$0xff] %vm1243, %v1022
      %1299 = vst.msk [vmem:[%s310 + $0x1b8] sm:$0xff] %vm1243, %v1025
      %1300 = vst.msk [vmem:[%s310 + $0x1c0] sm:$0xff] %vm1243, %v1028
      %1301 = vst.msk [vmem:[%s310 + $0x1c8] sm:$0xff] %vm1243, %v1031
      %1302 = vst.msk [vmem:[%s310 + $0x1d0] sm:$0xff] %vm1243, %v1034
      %1303 = vst.msk [vmem:[%s310 + $0x1d8] sm:$0xff] %vm1243, %v1037
      %1304 = vst.msk [vmem:[%s310 + $0x1e0] sm:$0xff] %vm1243, %v1040
      %1305 = vst.msk [vmem:[%s310 + $0x1e8] sm:$0xff] %vm1243, %v1043
      %1306 = vst.msk [vmem:[%s310 + $0x1f0] sm:$0xff] %vm1243, %v1046
      %1307 = vst.msk [vmem:[%s310 + $0x1f8] sm:$0xff] %vm1243, %v1049
      %1308 = vst.msk [vmem:[%s310 + $0x200] sm:$0xff] %vm1243, %v1052
      %1309 = vst.msk [vmem:[%s310 + $0x208] sm:$0xff] %vm1243, %v1055
      %1310 = vst.msk [vmem:[%s310 + $0x210] sm:$0xff] %vm1243, %v1058
      %1311 = vst.msk [vmem:[%s310 + $0x218] sm:$0xff] %vm1243, %v1061
      %1312 = vst.msk [vmem:[%s310 + $0x220] sm:$0xff] %vm1243, %v1064
      %1313 = vst.msk [vmem:[%s310 + $0x228] sm:$0xff] %vm1243, %v1067
      %1314 = vst.msk [vmem:[%s310 + $0x230] sm:$0xff] %vm1243, %v1070
      %1315 = vst.msk [vmem:[%s310 + $0x238] sm:$0xff] %vm1243, %v1073
      %1316 = vst.msk [vmem:[%s310 + $0x240] sm:$0xff] %vm1243, %v1076
      %1317 = vst.msk [vmem:[%s310 + $0x248] sm:$0xff] %vm1243, %v1079
      %1318 = vst.msk [vmem:[%s310 + $0x250] sm:$0xff] %vm1243, %v1082
      %1319 = vst.msk [vmem:[%s310 + $0x258] sm:$0xff] %vm1243, %v1085
      %1320 = vst.msk [vmem:[%s310 + $0x260] sm:$0xff] %vm1243, %v1088
      %1321 = vst.msk [vmem:[%s310 + $0x268] sm:$0xff] %vm1243, %v1091
      %1322 = vst.msk [vmem:[%s310 + $0x270] sm:$0xff] %vm1243, %v1094
      %1323 = vst.msk [vmem:[%s310 + $0x278] sm:$0xff] %vm1243, %v1097
      %1324 = vst.msk [vmem:[%s310 + $0x280] sm:$0xff] %vm1243, %v1100
      %1325 = vst.msk [vmem:[%s310 + $0x288] sm:$0xff] %vm1243, %v1103
      %1326 = vst.msk [vmem:[%s310 + $0x290] sm:$0xff] %vm1243, %v1106
      %1327 = vst.msk [vmem:[%s310 + $0x298] sm:$0xff] %vm1243, %v1109
      %1328 = vst.msk [vmem:[%s310 + $0x2a0] sm:$0xff] %vm1243, %v1112
      %1329 = vst.msk [vmem:[%s310 + $0x2a8] sm:$0xff] %vm1243, %v1115
      %1330 = vst.msk [vmem:[%s310 + $0x2b0] sm:$0xff] %vm1243, %v1118
      %1331 = vst.msk [vmem:[%s310 + $0x2b8] sm:$0xff] %vm1243, %v1121
      %1332 = vst.msk [vmem:[%s310 + $0x2c0] sm:$0xff] %vm1243, %v1124
      %1333 = vst.msk [vmem:[%s310 + $0x2c8] sm:$0xff] %vm1243, %v1127
      %1334 = vst.msk [vmem:[%s310 + $0x2d0] sm:$0xff] %vm1243, %v1130
      %1335 = vst.msk [vmem:[%s310 + $0x2d8] sm:$0xff] %vm1243, %v1133
      %1336 = vst.msk [vmem:[%s310 + $0x2e0] sm:$0xff] %vm1243, %v1136
      %1337 = vst.msk [vmem:[%s310 + $0x2e8] sm:$0xff] %vm1243, %v1139
      %1338 = vst.msk [vmem:[%s310 + $0x2f0] sm:$0xff] %vm1243, %v1142
      %1339 = vst.msk [vmem:[%s310 + $0x2f8] sm:$0xff] %vm1243, %v1145
      %1340 = vst.msk [vmem:[%s310 + $0x300] sm:$0xff] %vm1243, %v1148
      %1341 = vst.msk [vmem:[%s310 + $0x308] sm:$0xff] %vm1243, %v1151
      %1342 = vst.msk [vmem:[%s310 + $0x310] sm:$0xff] %vm1243, %v1154
      %1343 = vst.msk [vmem:[%s310 + $0x318] sm:$0xff] %vm1243, %v1157
      %1344 = vst.msk [vmem:[%s310 + $0x320] sm:$0xff] %vm1243, %v1160
      %1345 = vst.msk [vmem:[%s310 + $0x328] sm:$0xff] %vm1243, %v1163
      %1346 = vst.msk [vmem:[%s310 + $0x330] sm:$0xff] %vm1243, %v1166
      %1347 = vst.msk [vmem:[%s310 + $0x338] sm:$0xff] %vm1243, %v1169
      %1348 = vst.msk [vmem:[%s310 + $0x340] sm:$0xff] %vm1243, %v1172
      %1349 = vst.msk [vmem:[%s310 + $0x348] sm:$0xff] %vm1243, %v1175
      %1350 = vst.msk [vmem:[%s310 + $0x350] sm:$0xff] %vm1243, %v1178
      %1351 = vst.msk [vmem:[%s310 + $0x358] sm:$0xff] %vm1243, %v1181
      %1352 = vst.msk [vmem:[%s310 + $0x360] sm:$0xff] %vm1243, %v1184
      %1353 = vst.msk [vmem:[%s310 + $0x368] sm:$0xff] %vm1243, %v1187
      %1354 = vst.msk [vmem:[%s310 + $0x370] sm:$0xff] %vm1243, %v1190
      %1355 = vst.msk [vmem:[%s310 + $0x378] sm:$0xff] %vm1243, %v1193
      %1356 = vst.msk [vmem:[%s310 + $0x380] sm:$0xff] %vm1243, %v1196
      %1357 = vst.msk [vmem:[%s310 + $0x388] sm:$0xff] %vm1243, %v1199
      %1358 = vst.msk [vmem:[%s310 + $0x390] sm:$0xff] %vm1243, %v1202
      %1359 = vst.msk [vmem:[%s310 + $0x398] sm:$0xff] %vm1243, %v1205
      %1360 = vst.msk [vmem:[%s310 + $0x3a0] sm:$0xff] %vm1243, %v1208
      %1361 = vst.msk [vmem:[%s310 + $0x3a8] sm:$0xff] %vm1243, %v1211
      %1362 = vst.msk [vmem:[%s310 + $0x3b0] sm:$0xff] %vm1243, %v1214
      %1363 = vst.msk [vmem:[%s310 + $0x3b8] sm:$0xff] %vm1243, %v1217
      %1364 = vst.msk [vmem:[%s310 + $0x3c0] sm:$0xff] %vm1243, %v1220
      %1365 = vst.msk [vmem:[%s310 + $0x3c8] sm:$0xff] %vm1243, %v1223
      %1366 = vst.msk [vmem:[%s310 + $0x3d0] sm:$0xff] %vm1243, %v1226
      %1367 = vst.msk [vmem:[%s310 + $0x3d8] sm:$0xff] %vm1243, %v1229
      %1368 = vst.msk [vmem:[%s310 + $0x3e0] sm:$0xff] %vm1243, %v1232
      %1369 = vst.msk [vmem:[%s310 + $0x3e8] sm:$0xff] %vm1243, %v1235
      %1370 = vst.msk [vmem:[%s310 + $0x3f0] sm:$0xff] %vm1243, %v1238
      %1371 = vst.msk [vmem:[%s310 + $0x3f8] sm:$0xff] %vm1243, %v1241
      %v1372 = vld [vmem:[%s304] sm:$0xff]
      %v1373 = vld [vmem:[%s304 + $0x8] sm:$0xff]
      %v1374 = vld [vmem:[%s304 + $0x10] sm:$0xff]
      %v1375 = vld [vmem:[%s304 + $0x18] sm:$0xff]
      %v1376 = vld [vmem:[%s304 + $0x20] sm:$0xff]
      %v1377 = vld [vmem:[%s304 + $0x28] sm:$0xff]
      %v1378 = vld [vmem:[%s304 + $0x30] sm:$0xff]
      %v1379 = vld [vmem:[%s304 + $0x38] sm:$0xff]
      %v1380 = vld [vmem:[%s304 + $0x40] sm:$0xff]
      %v1381 = vld [vmem:[%s304 + $0x48] sm:$0xff]
      %v1382 = vld [vmem:[%s304 + $0x50] sm:$0xff]
      %v1383 = vld [vmem:[%s304 + $0x58] sm:$0xff]
      %v1384 = vld [vmem:[%s304 + $0x60] sm:$0xff]
      %v1385 = vld [vmem:[%s304 + $0x68] sm:$0xff]
      %v1386 = vld [vmem:[%s304 + $0x70] sm:$0xff]
      %v1387 = vld [vmem:[%s304 + $0x78] sm:$0xff]
      %v1388 = vld [vmem:[%s304 + $0x80] sm:$0xff]
      %v1389 = vld [vmem:[%s304 + $0x88] sm:$0xff]
      %v1390 = vld [vmem:[%s304 + $0x90] sm:$0xff]
      %v1391 = vld [vmem:[%s304 + $0x98] sm:$0xff]
      %v1392 = vld [vmem:[%s304 + $0xa0] sm:$0xff]
      %v1393 = vld [vmem:[%s304 + $0xa8] sm:$0xff]
      %v1394 = vld [vmem:[%s304 + $0xb0] sm:$0xff]
      %v1395 = vld [vmem:[%s304 + $0xb8] sm:$0xff]
      %v1396 = vld [vmem:[%s304 + $0xc0] sm:$0xff]
      %v1397 = vld [vmem:[%s304 + $0xc8] sm:$0xff]
      %v1398 = vld [vmem:[%s304 + $0xd0] sm:$0xff]
      %v1399 = vld [vmem:[%s304 + $0xd8] sm:$0xff]
      %v1400 = vld [vmem:[%s304 + $0xe0] sm:$0xff]
      %v1401 = vld [vmem:[%s304 + $0xe8] sm:$0xff]
      %v1402 = vld [vmem:[%s304 + $0xf0] sm:$0xff]
      %v1403 = vld [vmem:[%s304 + $0xf8] sm:$0xff]
      %v1404 = vld [vmem:[%s304 + $0x100] sm:$0xff]
      %v1405 = vld [vmem:[%s304 + $0x108] sm:$0xff]
      %v1406 = vld [vmem:[%s304 + $0x110] sm:$0xff]
      %v1407 = vld [vmem:[%s304 + $0x118] sm:$0xff]
      %v1408 = vld [vmem:[%s304 + $0x120] sm:$0xff]
      %v1409 = vld [vmem:[%s304 + $0x128] sm:$0xff]
      %v1410 = vld [vmem:[%s304 + $0x130] sm:$0xff]
      %v1411 = vld [vmem:[%s304 + $0x138] sm:$0xff]
      %v1412 = vld [vmem:[%s304 + $0x140] sm:$0xff]
      %v1413 = vld [vmem:[%s304 + $0x148] sm:$0xff]
      %v1414 = vld [vmem:[%s304 + $0x150] sm:$0xff]
      %v1415 = vld [vmem:[%s304 + $0x158] sm:$0xff]
      %v1416 = vld [vmem:[%s304 + $0x160] sm:$0xff]
      %v1417 = vld [vmem:[%s304 + $0x168] sm:$0xff]
      %v1418 = vld [vmem:[%s304 + $0x170] sm:$0xff]
      %v1419 = vld [vmem:[%s304 + $0x178] sm:$0xff]
      %v1420 = vld [vmem:[%s304 + $0x180] sm:$0xff]
      %v1421 = vld [vmem:[%s304 + $0x188] sm:$0xff]
      %v1422 = vld [vmem:[%s304 + $0x190] sm:$0xff]
      %v1423 = vld [vmem:[%s304 + $0x198] sm:$0xff]
      %v1424 = vld [vmem:[%s304 + $0x1a0] sm:$0xff]
      %v1425 = vld [vmem:[%s304 + $0x1a8] sm:$0xff]
      %v1426 = vld [vmem:[%s304 + $0x1b0] sm:$0xff]
      %v1427 = vld [vmem:[%s304 + $0x1b8] sm:$0xff]
      %v1428 = vld [vmem:[%s304 + $0x1c0] sm:$0xff]
      %v1429 = vld [vmem:[%s304 + $0x1c8] sm:$0xff]
      %v1430 = vld [vmem:[%s304 + $0x1d0] sm:$0xff]
      %v1431 = vld [vmem:[%s304 + $0x1d8] sm:$0xff]
      %v1432 = vld [vmem:[%s304 + $0x1e0] sm:$0xff]
      %v1433 = vld [vmem:[%s304 + $0x1e8] sm:$0xff]
      %v1434 = vld [vmem:[%s304 + $0x1f0] sm:$0xff]
      %v1435 = vld [vmem:[%s304 + $0x1f8] sm:$0xff]
      %v1436 = vld [vmem:[%s304 + $0x200] sm:$0xff]
      %v1437 = vld [vmem:[%s304 + $0x208] sm:$0xff]
      %v1438 = vld [vmem:[%s304 + $0x210] sm:$0xff]
      %v1439 = vld [vmem:[%s304 + $0x218] sm:$0xff]
      %v1440 = vld [vmem:[%s304 + $0x220] sm:$0xff]
      %v1441 = vld [vmem:[%s304 + $0x228] sm:$0xff]
      %v1442 = vld [vmem:[%s304 + $0x230] sm:$0xff]
      %v1443 = vld [vmem:[%s304 + $0x238] sm:$0xff]
      %v1444 = vld [vmem:[%s304 + $0x240] sm:$0xff]
      %v1445 = vld [vmem:[%s304 + $0x248] sm:$0xff]
      %v1446 = vld [vmem:[%s304 + $0x250] sm:$0xff]
      %v1447 = vld [vmem:[%s304 + $0x258] sm:$0xff]
      %v1448 = vld [vmem:[%s304 + $0x260] sm:$0xff]
      %v1449 = vld [vmem:[%s304 + $0x268] sm:$0xff]
      %v1450 = vld [vmem:[%s304 + $0x270] sm:$0xff]
      %v1451 = vld [vmem:[%s304 + $0x278] sm:$0xff]
      %v1452 = vld [vmem:[%s304 + $0x280] sm:$0xff]
      %v1453 = vld [vmem:[%s304 + $0x288] sm:$0xff]
      %v1454 = vld [vmem:[%s304 + $0x290] sm:$0xff]
      %v1455 = vld [vmem:[%s304 + $0x298] sm:$0xff]
      %v1456 = vld [vmem:[%s304 + $0x2a0] sm:$0xff]
      %v1457 = vld [vmem:[%s304 + $0x2a8] sm:$0xff]
      %v1458 = vld [vmem:[%s304 + $0x2b0] sm:$0xff]
      %v1459 = vld [vmem:[%s304 + $0x2b8] sm:$0xff]
      %v1460 = vld [vmem:[%s304 + $0x2c0] sm:$0xff]
      %v1461 = vld [vmem:[%s304 + $0x2c8] sm:$0xff]
      %v1462 = vld [vmem:[%s304 + $0x2d0] sm:$0xff]
      %v1463 = vld [vmem:[%s304 + $0x2d8] sm:$0xff]
      %v1464 = vld [vmem:[%s304 + $0x2e0] sm:$0xff]
      %v1465 = vld [vmem:[%s304 + $0x2e8] sm:$0xff]
      %v1466 = vld [vmem:[%s304 + $0x2f0] sm:$0xff]
      %v1467 = vld [vmem:[%s304 + $0x2f8] sm:$0xff]
      %v1468 = vld [vmem:[%s304 + $0x300] sm:$0xff]
      %v1469 = vld [vmem:[%s304 + $0x308] sm:$0xff]
      %v1470 = vld [vmem:[%s304 + $0x310] sm:$0xff]
      %v1471 = vld [vmem:[%s304 + $0x318] sm:$0xff]
      %v1472 = vld [vmem:[%s304 + $0x320] sm:$0xff]
      %v1473 = vld [vmem:[%s304 + $0x328] sm:$0xff]
      %v1474 = vld [vmem:[%s304 + $0x330] sm:$0xff]
      %v1475 = vld [vmem:[%s304 + $0x338] sm:$0xff]
      %v1476 = vld [vmem:[%s304 + $0x340] sm:$0xff]
      %v1477 = vld [vmem:[%s304 + $0x348] sm:$0xff]
      %v1478 = vld [vmem:[%s304 + $0x350] sm:$0xff]
      %v1479 = vld [vmem:[%s304 + $0x358] sm:$0xff]
      %v1480 = vld [vmem:[%s304 + $0x360] sm:$0xff]
      %v1481 = vld [vmem:[%s304 + $0x368] sm:$0xff]
      %v1482 = vld [vmem:[%s304 + $0x370] sm:$0xff]
      %v1483 = vld [vmem:[%s304 + $0x378] sm:$0xff]
      %v1484 = vld [vmem:[%s304 + $0x380] sm:$0xff]
      %v1485 = vld [vmem:[%s304 + $0x388] sm:$0xff]
      %v1486 = vld [vmem:[%s304 + $0x390] sm:$0xff]
      %v1487 = vld [vmem:[%s304 + $0x398] sm:$0xff]
      %v1488 = vld [vmem:[%s304 + $0x3a0] sm:$0xff]
      %v1489 = vld [vmem:[%s304 + $0x3a8] sm:$0xff]
      %v1490 = vld [vmem:[%s304 + $0x3b0] sm:$0xff]
      %v1491 = vld [vmem:[%s304 + $0x3b8] sm:$0xff]
      %v1492 = vld [vmem:[%s304 + $0x3c0] sm:$0xff]
      %v1493 = vld [vmem:[%s304 + $0x3c8] sm:$0xff]
      %v1494 = vld [vmem:[%s304 + $0x3d0] sm:$0xff]
      %v1495 = vld [vmem:[%s304 + $0x3d8] sm:$0xff]
      %v1496 = vld [vmem:[%s304 + $0x3e0] sm:$0xff]
      %v1497 = vld [vmem:[%s304 + $0x3e8] sm:$0xff]
      %v1498 = vld [vmem:[%s304 + $0x3f0] sm:$0xff]
      %v1499 = vld [vmem:[%s304 + $0x3f8] sm:$0xff]
      %v1500 = vld [vmem:[%s3] sm:$0x7]
      %v1501 = vld [vmem:[%s5] sm:$0x1]
      %v1503 = vperm.slane %v1501, 0
      %vm1505 = vcmask 23552
      %v1507 = vsel %vm1505, %v1372, 0
      %v1510 = vsel %vm1505, %v1373, 0
      %v1513 = vsel %vm1505, %v1374, 0
      %v1516 = vsel %vm1505, %v1375, 0
      %v1519 = vsel %vm1505, %v1376, 0
      %v1522 = vsel %vm1505, %v1377, 0
      %v1525 = vsel %vm1505, %v1378, 0
      %v1528 = vsel %vm1505, %v1379, 0
      %v1531 = vsel %vm1505, %v1380, 0
      %v1534 = vsel %vm1505, %v1381, 0
      %v1537 = vsel %vm1505, %v1382, 0
      %v1540 = vsel %vm1505, %v1383, 0
      %v1543 = vsel %vm1505, %v1384, 0
      %v1546 = vsel %vm1505, %v1385, 0
      %v1549 = vsel %vm1505, %v1386, 0
      %v1552 = vsel %vm1505, %v1387, 0
      %v1555 = vsel %vm1505, %v1388, 0
      %v1558 = vsel %vm1505, %v1389, 0
      %v1561 = vsel %vm1505, %v1390, 0
      %v1564 = vsel %vm1505, %v1391, 0
      %v1567 = vsel %vm1505, %v1392, 0
      %v1570 = vsel %vm1505, %v1393, 0
      %v1573 = vsel %vm1505, %v1394, 0
      %v1576 = vsel %vm1505, %v1395, 0
      %v1579 = vsel %vm1505, %v1396, 0
      %v1582 = vsel %vm1505, %v1397, 0
      %v1585 = vsel %vm1505, %v1398, 0
      %v1588 = vsel %vm1505, %v1399, 0
      %v1591 = vsel %vm1505, %v1400, 0
      %v1594 = vsel %vm1505, %v1401, 0
      %v1597 = vsel %vm1505, %v1402, 0
      %v1600 = vsel %vm1505, %v1403, 0
      %v1603 = vsel %vm1505, %v1404, 0
      %v1606 = vsel %vm1505, %v1405, 0
      %v1609 = vsel %vm1505, %v1406, 0
      %v1612 = vsel %vm1505, %v1407, 0
      %v1615 = vsel %vm1505, %v1408, 0
      %v1618 = vsel %vm1505, %v1409, 0
      %v1621 = vsel %vm1505, %v1410, 0
      %v1624 = vsel %vm1505, %v1411, 0
      %v1627 = vsel %vm1505, %v1412, 0
      %v1630 = vsel %vm1505, %v1413, 0
      %v1633 = vsel %vm1505, %v1414, 0
      %v1636 = vsel %vm1505, %v1415, 0
      %v1639 = vsel %vm1505, %v1416, 0
      %v1642 = vsel %vm1505, %v1417, 0
      %v1645 = vsel %vm1505, %v1418, 0
      %v1648 = vsel %vm1505, %v1419, 0
      %v1651 = vsel %vm1505, %v1420, 0
      %v1654 = vsel %vm1505, %v1421, 0
      %v1657 = vsel %vm1505, %v1422, 0
      %v1660 = vsel %vm1505, %v1423, 0
      %v1663 = vsel %vm1505, %v1424, 0
      %v1666 = vsel %vm1505, %v1425, 0
      %v1669 = vsel %vm1505, %v1426, 0
      %v1672 = vsel %vm1505, %v1427, 0
      %v1675 = vsel %vm1505, %v1428, 0
      %v1678 = vsel %vm1505, %v1429, 0
      %v1681 = vsel %vm1505, %v1430, 0
      %v1684 = vsel %vm1505, %v1431, 0
      %v1687 = vsel %vm1505, %v1432, 0
      %v1690 = vsel %vm1505, %v1433, 0
      %v1693 = vsel %vm1505, %v1434, 0
      %v1696 = vsel %vm1505, %v1435, 0
      %v1699 = vsel %vm1505, %v1436, 0
      %v1702 = vsel %vm1505, %v1437, 0
      %v1705 = vsel %vm1505, %v1438, 0
      %v1708 = vsel %vm1505, %v1439, 0
      %v1711 = vsel %vm1505, %v1440, 0
      %v1714 = vsel %vm1505, %v1441, 0
      %v1717 = vsel %vm1505, %v1442, 0
      %v1720 = vsel %vm1505, %v1443, 0
      %v1723 = vsel %vm1505, %v1444, 0
      %v1726 = vsel %vm1505, %v1445, 0
      %v1729 = vsel %vm1505, %v1446, 0
      %v1732 = vsel %vm1505, %v1447, 0
      %v1735 = vsel %vm1505, %v1448, 0
      %v1738 = vsel %vm1505, %v1449, 0
      %v1741 = vsel %vm1505, %v1450, 0
      %v1744 = vsel %vm1505, %v1451, 0
      %v1747 = vsel %vm1505, %v1452, 0
      %v1750 = vsel %vm1505, %v1453, 0
      %v1753 = vsel %vm1505, %v1454, 0
      %v1756 = vsel %vm1505, %v1455, 0
      %v1759 = vsel %vm1505, %v1456, 0
      %v1762 = vsel %vm1505, %v1457, 0
      %v1765 = vsel %vm1505, %v1458, 0
      %v1768 = vsel %vm1505, %v1459, 0
      %v1771 = vsel %vm1505, %v1460, 0
      %v1774 = vsel %vm1505, %v1461, 0
      %v1777 = vsel %vm1505, %v1462, 0
      %v1780 = vsel %vm1505, %v1463, 0
      %v1783 = vsel %vm1505, %v1464, 0
      %v1786 = vsel %vm1505, %v1465, 0
      %v1789 = vsel %vm1505, %v1466, 0
      %v1792 = vsel %vm1505, %v1467, 0
      %v1795 = vsel %vm1505, %v1468, 0
      %v1798 = vsel %vm1505, %v1469, 0
      %v1801 = vsel %vm1505, %v1470, 0
      %v1804 = vsel %vm1505, %v1471, 0
      %v1807 = vsel %vm1505, %v1472, 0
      %v1810 = vsel %vm1505, %v1473, 0
      %v1813 = vsel %vm1505, %v1474, 0
      %v1816 = vsel %vm1505, %v1475, 0
      %v1819 = vsel %vm1505, %v1476, 0
      %v1822 = vsel %vm1505, %v1477, 0
      %v1825 = vsel %vm1505, %v1478, 0
      %v1828 = vsel %vm1505, %v1479, 0
      %v1831 = vsel %vm1505, %v1480, 0
      %v1834 = vsel %vm1505, %v1481, 0
      %v1837 = vsel %vm1505, %v1482, 0
      %v1840 = vsel %vm1505, %v1483, 0
      %v1843 = vsel %vm1505, %v1484, 0
      %v1846 = vsel %vm1505, %v1485, 0
      %v1849 = vsel %vm1505, %v1486, 0
      %v1852 = vsel %vm1505, %v1487, 0
      %v1855 = vsel %vm1505, %v1488, 0
      %v1858 = vsel %vm1505, %v1489, 0
      %v1861 = vsel %vm1505, %v1490, 0
      %v1864 = vsel %vm1505, %v1491, 0
      %v1867 = vsel %vm1505, %v1492, 0
      %v1870 = vsel %vm1505, %v1493, 0
      %v1873 = vsel %vm1505, %v1494, 0
      %v1876 = vsel %vm1505, %v1495, 0
      %v1879 = vsel %vm1505, %v1496, 0
      %v1882 = vsel %vm1505, %v1497, 0
      %v1885 = vsel %vm1505, %v1498, 0
      %v1888 = vsel %vm1505, %v1499, 0
      %vm1890 = vcmask 1042432
      %v1892 = vsel %vm1890, %v1500, 0
      %1894 = vmatpush.msra.mxu0 0.0
      %1895 = vmatpush.msra.mxu0 0.0
      %1896 = vmatpush.msra.mxu0 0.0
      %1897 = vmatpush.msra.mxu0 0.0
      %1898 = vmatpush.msra.mxu0 0.0
      %1899 = vmatpush.msra.mxu0 0.0
      %1900 = vmatpush.msra.mxu0 0.0
      %1901 = vmatpush.msra.mxu0 0.0
      %1902 = vmatpush.msra.mxu0 0.0
      %1903 = vmatpush.msra.mxu0 0.0
      %1904 = vmatpush.msra.mxu0 0.0
      %1905 = vmatpush.msra.mxu0 0.0
      %1906 = vmatpush.msra.mxu0 0.0
      %1907 = vmatpush.msra.mxu0 0.0
      %1908 = vmatpush.msra.mxu0 0.0
      %1909 = vmatpush.msra.mxu0 %v1892
      %1910 = vmatmul.f32.gmra.mxu0 %v1507
      %v1911 = vpop.f32.mrf.mxu0
      %v1912 = vadd.f32 %v1503, %v1911
      %1913 = vmatmul.f32.gmra.mxu0 %v1510
      %v1914 = vpop.f32.mrf.mxu0
      %v1915 = vadd.f32 %v1503, %v1914
      %1916 = vmatmul.f32.gmra.mxu0 %v1513
      %v1917 = vpop.f32.mrf.mxu0
      %v1918 = vadd.f32 %v1503, %v1917
      %1919 = vmatmul.f32.gmra.mxu0 %v1516
      %v1920 = vpop.f32.mrf.mxu0
      %v1921 = vadd.f32 %v1503, %v1920
      %1922 = vmatmul.f32.gmra.mxu0 %v1519
      %v1923 = vpop.f32.mrf.mxu0
      %v1924 = vadd.f32 %v1503, %v1923
      %1925 = vmatmul.f32.gmra.mxu0 %v1522
      %v1926 = vpop.f32.mrf.mxu0
      %v1927 = vadd.f32 %v1503, %v1926
      %1928 = vmatmul.f32.gmra.mxu0 %v1525
      %v1929 = vpop.f32.mrf.mxu0
      %v1930 = vadd.f32 %v1503, %v1929
      %1931 = vmatmul.f32.gmra.mxu0 %v1528
      %v1932 = vpop.f32.mrf.mxu0
      %v1933 = vadd.f32 %v1503, %v1932
      %1934 = vmatmul.f32.gmra.mxu0 %v1531
      %v1935 = vpop.f32.mrf.mxu0
      %v1936 = vadd.f32 %v1503, %v1935
      %1937 = vmatmul.f32.gmra.mxu0 %v1534
      %v1938 = vpop.f32.mrf.mxu0
      %v1939 = vadd.f32 %v1503, %v1938
      %1940 = vmatmul.f32.gmra.mxu0 %v1537
      %v1941 = vpop.f32.mrf.mxu0
      %v1942 = vadd.f32 %v1503, %v1941
      %1943 = vmatmul.f32.gmra.mxu0 %v1540
      %v1944 = vpop.f32.mrf.mxu0
      %v1945 = vadd.f32 %v1503, %v1944
      %1946 = vmatmul.f32.gmra.mxu0 %v1543
      %v1947 = vpop.f32.mrf.mxu0
      %v1948 = vadd.f32 %v1503, %v1947
      %1949 = vmatmul.f32.gmra.mxu0 %v1546
      %v1950 = vpop.f32.mrf.mxu0
      %v1951 = vadd.f32 %v1503, %v1950
      %1952 = vmatmul.f32.gmra.mxu0 %v1549
      %v1953 = vpop.f32.mrf.mxu0
      %v1954 = vadd.f32 %v1503, %v1953
      %1955 = vmatmul.f32.gmra.mxu0 %v1552
      %v1956 = vpop.f32.mrf.mxu0
      %v1957 = vadd.f32 %v1503, %v1956
      %1958 = vmatmul.f32.gmra.mxu0 %v1555
      %v1959 = vpop.f32.mrf.mxu0
      %v1960 = vadd.f32 %v1503, %v1959
      %1961 = vmatmul.f32.gmra.mxu0 %v1558
      %v1962 = vpop.f32.mrf.mxu0
      %v1963 = vadd.f32 %v1503, %v1962
      %1964 = vmatmul.f32.gmra.mxu0 %v1561
      %v1965 = vpop.f32.mrf.mxu0
      %v1966 = vadd.f32 %v1503, %v1965
      %1967 = vmatmul.f32.gmra.mxu0 %v1564
      %v1968 = vpop.f32.mrf.mxu0
      %v1969 = vadd.f32 %v1503, %v1968
      %1970 = vmatmul.f32.gmra.mxu0 %v1567
      %v1971 = vpop.f32.mrf.mxu0
      %v1972 = vadd.f32 %v1503, %v1971
      %1973 = vmatmul.f32.gmra.mxu0 %v1570
      %v1974 = vpop.f32.mrf.mxu0
      %v1975 = vadd.f32 %v1503, %v1974
      %1976 = vmatmul.f32.gmra.mxu0 %v1573
      %v1977 = vpop.f32.mrf.mxu0
      %v1978 = vadd.f32 %v1503, %v1977
      %1979 = vmatmul.f32.gmra.mxu0 %v1576
      %v1980 = vpop.f32.mrf.mxu0
      %v1981 = vadd.f32 %v1503, %v1980
      %1982 = vmatmul.f32.gmra.mxu0 %v1579
      %v1983 = vpop.f32.mrf.mxu0
      %v1984 = vadd.f32 %v1503, %v1983
      %1985 = vmatmul.f32.gmra.mxu0 %v1582
      %v1986 = vpop.f32.mrf.mxu0
      %v1987 = vadd.f32 %v1503, %v1986
      %1988 = vmatmul.f32.gmra.mxu0 %v1585
      %v1989 = vpop.f32.mrf.mxu0
      %v1990 = vadd.f32 %v1503, %v1989
      %1991 = vmatmul.f32.gmra.mxu0 %v1588
      %v1992 = vpop.f32.mrf.mxu0
      %v1993 = vadd.f32 %v1503, %v1992
      %1994 = vmatmul.f32.gmra.mxu0 %v1591
      %v1995 = vpop.f32.mrf.mxu0
      %v1996 = vadd.f32 %v1503, %v1995
      %1997 = vmatmul.f32.gmra.mxu0 %v1594
      %v1998 = vpop.f32.mrf.mxu0
      %v1999 = vadd.f32 %v1503, %v1998
      %2000 = vmatmul.f32.gmra.mxu0 %v1597
      %v2001 = vpop.f32.mrf.mxu0
      %v2002 = vadd.f32 %v1503, %v2001
      %2003 = vmatmul.f32.gmra.mxu0 %v1600
      %v2004 = vpop.f32.mrf.mxu0
      %v2005 = vadd.f32 %v1503, %v2004
      %2006 = vmatmul.f32.gmra.mxu0 %v1603
      %v2007 = vpop.f32.mrf.mxu0
      %v2008 = vadd.f32 %v1503, %v2007
      %2009 = vmatmul.f32.gmra.mxu0 %v1606
      %v2010 = vpop.f32.mrf.mxu0
      %v2011 = vadd.f32 %v1503, %v2010
      %2012 = vmatmul.f32.gmra.mxu0 %v1609
      %v2013 = vpop.f32.mrf.mxu0
      %v2014 = vadd.f32 %v1503, %v2013
      %2015 = vmatmul.f32.gmra.mxu0 %v1612
      %v2016 = vpop.f32.mrf.mxu0
      %v2017 = vadd.f32 %v1503, %v2016
      %2018 = vmatmul.f32.gmra.mxu0 %v1615
      %v2019 = vpop.f32.mrf.mxu0
      %v2020 = vadd.f32 %v1503, %v2019
      %2021 = vmatmul.f32.gmra.mxu0 %v1618
      %v2022 = vpop.f32.mrf.mxu0
      %v2023 = vadd.f32 %v1503, %v2022
      %2024 = vmatmul.f32.gmra.mxu0 %v1621
      %v2025 = vpop.f32.mrf.mxu0
      %v2026 = vadd.f32 %v1503, %v2025
      %2027 = vmatmul.f32.gmra.mxu0 %v1624
      %v2028 = vpop.f32.mrf.mxu0
      %v2029 = vadd.f32 %v1503, %v2028
      %2030 = vmatmul.f32.gmra.mxu0 %v1627
      %v2031 = vpop.f32.mrf.mxu0
      %v2032 = vadd.f32 %v1503, %v2031
      %2033 = vmatmul.f32.gmra.mxu0 %v1630
      %v2034 = vpop.f32.mrf.mxu0
      %v2035 = vadd.f32 %v1503, %v2034
      %2036 = vmatmul.f32.gmra.mxu0 %v1633
      %v2037 = vpop.f32.mrf.mxu0
      %v2038 = vadd.f32 %v1503, %v2037
      %2039 = vmatmul.f32.gmra.mxu0 %v1636
      %v2040 = vpop.f32.mrf.mxu0
      %v2041 = vadd.f32 %v1503, %v2040
      %2042 = vmatmul.f32.gmra.mxu0 %v1639
      %v2043 = vpop.f32.mrf.mxu0
      %v2044 = vadd.f32 %v1503, %v2043
      %2045 = vmatmul.f32.gmra.mxu0 %v1642
      %v2046 = vpop.f32.mrf.mxu0
      %v2047 = vadd.f32 %v1503, %v2046
      %2048 = vmatmul.f32.gmra.mxu0 %v1645
      %v2049 = vpop.f32.mrf.mxu0
      %v2050 = vadd.f32 %v1503, %v2049
      %2051 = vmatmul.f32.gmra.mxu0 %v1648
      %v2052 = vpop.f32.mrf.mxu0
      %v2053 = vadd.f32 %v1503, %v2052
      %2054 = vmatmul.f32.gmra.mxu0 %v1651
      %v2055 = vpop.f32.mrf.mxu0
      %v2056 = vadd.f32 %v1503, %v2055
      %2057 = vmatmul.f32.gmra.mxu0 %v1654
      %v2058 = vpop.f32.mrf.mxu0
      %v2059 = vadd.f32 %v1503, %v2058
      %2060 = vmatmul.f32.gmra.mxu0 %v1657
      %v2061 = vpop.f32.mrf.mxu0
      %v2062 = vadd.f32 %v1503, %v2061
      %2063 = vmatmul.f32.gmra.mxu0 %v1660
      %v2064 = vpop.f32.mrf.mxu0
      %v2065 = vadd.f32 %v1503, %v2064
      %2066 = vmatmul.f32.gmra.mxu0 %v1663
      %v2067 = vpop.f32.mrf.mxu0
      %v2068 = vadd.f32 %v1503, %v2067
      %2069 = vmatmul.f32.gmra.mxu0 %v1666
      %v2070 = vpop.f32.mrf.mxu0
      %v2071 = vadd.f32 %v1503, %v2070
      %2072 = vmatmul.f32.gmra.mxu0 %v1669
      %v2073 = vpop.f32.mrf.mxu0
      %v2074 = vadd.f32 %v1503, %v2073
      %2075 = vmatmul.f32.gmra.mxu0 %v1672
      %v2076 = vpop.f32.mrf.mxu0
      %v2077 = vadd.f32 %v1503, %v2076
      %2078 = vmatmul.f32.gmra.mxu0 %v1675
      %v2079 = vpop.f32.mrf.mxu0
      %v2080 = vadd.f32 %v1503, %v2079
      %2081 = vmatmul.f32.gmra.mxu0 %v1678
      %v2082 = vpop.f32.mrf.mxu0
      %v2083 = vadd.f32 %v1503, %v2082
      %2084 = vmatmul.f32.gmra.mxu0 %v1681
      %v2085 = vpop.f32.mrf.mxu0
      %v2086 = vadd.f32 %v1503, %v2085
      %2087 = vmatmul.f32.gmra.mxu0 %v1684
      %v2088 = vpop.f32.mrf.mxu0
      %v2089 = vadd.f32 %v1503, %v2088
      %2090 = vmatmul.f32.gmra.mxu0 %v1687
      %v2091 = vpop.f32.mrf.mxu0
      %v2092 = vadd.f32 %v1503, %v2091
      %2093 = vmatmul.f32.gmra.mxu0 %v1690
      %v2094 = vpop.f32.mrf.mxu0
      %v2095 = vadd.f32 %v1503, %v2094
      %2096 = vmatmul.f32.gmra.mxu0 %v1693
      %v2097 = vpop.f32.mrf.mxu0
      %v2098 = vadd.f32 %v1503, %v2097
      %2099 = vmatmul.f32.gmra.mxu0 %v1696
      %v2100 = vpop.f32.mrf.mxu0
      %v2101 = vadd.f32 %v1503, %v2100
      %2102 = vmatmul.f32.gmra.mxu0 %v1699
      %v2103 = vpop.f32.mrf.mxu0
      %v2104 = vadd.f32 %v1503, %v2103
      %2105 = vmatmul.f32.gmra.mxu0 %v1702
      %v2106 = vpop.f32.mrf.mxu0
      %v2107 = vadd.f32 %v1503, %v2106
      %2108 = vmatmul.f32.gmra.mxu0 %v1705
      %v2109 = vpop.f32.mrf.mxu0
      %v2110 = vadd.f32 %v1503, %v2109
      %2111 = vmatmul.f32.gmra.mxu0 %v1708
      %v2112 = vpop.f32.mrf.mxu0
      %v2113 = vadd.f32 %v1503, %v2112
      %2114 = vmatmul.f32.gmra.mxu0 %v1711
      %v2115 = vpop.f32.mrf.mxu0
      %v2116 = vadd.f32 %v1503, %v2115
      %2117 = vmatmul.f32.gmra.mxu0 %v1714
      %v2118 = vpop.f32.mrf.mxu0
      %v2119 = vadd.f32 %v1503, %v2118
      %2120 = vmatmul.f32.gmra.mxu0 %v1717
      %v2121 = vpop.f32.mrf.mxu0
      %v2122 = vadd.f32 %v1503, %v2121
      %2123 = vmatmul.f32.gmra.mxu0 %v1720
      %v2124 = vpop.f32.mrf.mxu0
      %v2125 = vadd.f32 %v1503, %v2124
      %2126 = vmatmul.f32.gmra.mxu0 %v1723
      %v2127 = vpop.f32.mrf.mxu0
      %v2128 = vadd.f32 %v1503, %v2127
      %2129 = vmatmul.f32.gmra.mxu0 %v1726
      %v2130 = vpop.f32.mrf.mxu0
      %v2131 = vadd.f32 %v1503, %v2130
      %2132 = vmatmul.f32.gmra.mxu0 %v1729
      %v2133 = vpop.f32.mrf.mxu0
      %v2134 = vadd.f32 %v1503, %v2133
      %2135 = vmatmul.f32.gmra.mxu0 %v1732
      %v2136 = vpop.f32.mrf.mxu0
      %v2137 = vadd.f32 %v1503, %v2136
      %2138 = vmatmul.f32.gmra.mxu0 %v1735
      %v2139 = vpop.f32.mrf.mxu0
      %v2140 = vadd.f32 %v1503, %v2139
      %2141 = vmatmul.f32.gmra.mxu0 %v1738
      %v2142 = vpop.f32.mrf.mxu0
      %v2143 = vadd.f32 %v1503, %v2142
      %2144 = vmatmul.f32.gmra.mxu0 %v1741
      %v2145 = vpop.f32.mrf.mxu0
      %v2146 = vadd.f32 %v1503, %v2145
      %2147 = vmatmul.f32.gmra.mxu0 %v1744
      %v2148 = vpop.f32.mrf.mxu0
      %v2149 = vadd.f32 %v1503, %v2148
      %2150 = vmatmul.f32.gmra.mxu0 %v1747
      %v2151 = vpop.f32.mrf.mxu0
      %v2152 = vadd.f32 %v1503, %v2151
      %2153 = vmatmul.f32.gmra.mxu0 %v1750
      %v2154 = vpop.f32.mrf.mxu0
      %v2155 = vadd.f32 %v1503, %v2154
      %2156 = vmatmul.f32.gmra.mxu0 %v1753
      %v2157 = vpop.f32.mrf.mxu0
      %v2158 = vadd.f32 %v1503, %v2157
      %2159 = vmatmul.f32.gmra.mxu0 %v1756
      %v2160 = vpop.f32.mrf.mxu0
      %v2161 = vadd.f32 %v1503, %v2160
      %2162 = vmatmul.f32.gmra.mxu0 %v1759
      %v2163 = vpop.f32.mrf.mxu0
      %v2164 = vadd.f32 %v1503, %v2163
      %2165 = vmatmul.f32.gmra.mxu0 %v1762
      %v2166 = vpop.f32.mrf.mxu0
      %v2167 = vadd.f32 %v1503, %v2166
      %2168 = vmatmul.f32.gmra.mxu0 %v1765
      %v2169 = vpop.f32.mrf.mxu0
      %v2170 = vadd.f32 %v1503, %v2169
      %2171 = vmatmul.f32.gmra.mxu0 %v1768
      %v2172 = vpop.f32.mrf.mxu0
      %v2173 = vadd.f32 %v1503, %v2172
      %2174 = vmatmul.f32.gmra.mxu0 %v1771
      %v2175 = vpop.f32.mrf.mxu0
      %v2176 = vadd.f32 %v1503, %v2175
      %2177 = vmatmul.f32.gmra.mxu0 %v1774
      %v2178 = vpop.f32.mrf.mxu0
      %v2179 = vadd.f32 %v1503, %v2178
      %2180 = vmatmul.f32.gmra.mxu0 %v1777
      %v2181 = vpop.f32.mrf.mxu0
      %v2182 = vadd.f32 %v1503, %v2181
      %2183 = vmatmul.f32.gmra.mxu0 %v1780
      %v2184 = vpop.f32.mrf.mxu0
      %v2185 = vadd.f32 %v1503, %v2184
      %2186 = vmatmul.f32.gmra.mxu0 %v1783
      %v2187 = vpop.f32.mrf.mxu0
      %v2188 = vadd.f32 %v1503, %v2187
      %2189 = vmatmul.f32.gmra.mxu0 %v1786
      %v2190 = vpop.f32.mrf.mxu0
      %v2191 = vadd.f32 %v1503, %v2190
      %2192 = vmatmul.f32.gmra.mxu0 %v1789
      %v2193 = vpop.f32.mrf.mxu0
      %v2194 = vadd.f32 %v1503, %v2193
      %2195 = vmatmul.f32.gmra.mxu0 %v1792
      %v2196 = vpop.f32.mrf.mxu0
      %v2197 = vadd.f32 %v1503, %v2196
      %2198 = vmatmul.f32.gmra.mxu0 %v1795
      %v2199 = vpop.f32.mrf.mxu0
      %v2200 = vadd.f32 %v1503, %v2199
      %2201 = vmatmul.f32.gmra.mxu0 %v1798
      %v2202 = vpop.f32.mrf.mxu0
      %v2203 = vadd.f32 %v1503, %v2202
      %2204 = vmatmul.f32.gmra.mxu0 %v1801
      %v2205 = vpop.f32.mrf.mxu0
      %v2206 = vadd.f32 %v1503, %v2205
      %2207 = vmatmul.f32.gmra.mxu0 %v1804
      %v2208 = vpop.f32.mrf.mxu0
      %v2209 = vadd.f32 %v1503, %v2208
      %2210 = vmatmul.f32.gmra.mxu0 %v1807
      %v2211 = vpop.f32.mrf.mxu0
      %v2212 = vadd.f32 %v1503, %v2211
      %2213 = vmatmul.f32.gmra.mxu0 %v1810
      %v2214 = vpop.f32.mrf.mxu0
      %v2215 = vadd.f32 %v1503, %v2214
      %2216 = vmatmul.f32.gmra.mxu0 %v1813
      %v2217 = vpop.f32.mrf.mxu0
      %v2218 = vadd.f32 %v1503, %v2217
      %2219 = vmatmul.f32.gmra.mxu0 %v1816
      %v2220 = vpop.f32.mrf.mxu0
      %v2221 = vadd.f32 %v1503, %v2220
      %2222 = vmatmul.f32.gmra.mxu0 %v1819
      %v2223 = vpop.f32.mrf.mxu0
      %v2224 = vadd.f32 %v1503, %v2223
      %2225 = vmatmul.f32.gmra.mxu0 %v1822
      %v2226 = vpop.f32.mrf.mxu0
      %v2227 = vadd.f32 %v1503, %v2226
      %2228 = vmatmul.f32.gmra.mxu0 %v1825
      %v2229 = vpop.f32.mrf.mxu0
      %v2230 = vadd.f32 %v1503, %v2229
      %2231 = vmatmul.f32.gmra.mxu0 %v1828
      %v2232 = vpop.f32.mrf.mxu0
      %v2233 = vadd.f32 %v1503, %v2232
      %2234 = vmatmul.f32.gmra.mxu0 %v1831
      %v2235 = vpop.f32.mrf.mxu0
      %v2236 = vadd.f32 %v1503, %v2235
      %2237 = vmatmul.f32.gmra.mxu0 %v1834
      %v2238 = vpop.f32.mrf.mxu0
      %v2239 = vadd.f32 %v1503, %v2238
      %2240 = vmatmul.f32.gmra.mxu0 %v1837
      %v2241 = vpop.f32.mrf.mxu0
      %v2242 = vadd.f32 %v1503, %v2241
      %2243 = vmatmul.f32.gmra.mxu0 %v1840
      %v2244 = vpop.f32.mrf.mxu0
      %v2245 = vadd.f32 %v1503, %v2244
      %2246 = vmatmul.f32.gmra.mxu0 %v1843
      %v2247 = vpop.f32.mrf.mxu0
      %v2248 = vadd.f32 %v1503, %v2247
      %2249 = vmatmul.f32.gmra.mxu0 %v1846
      %v2250 = vpop.f32.mrf.mxu0
      %v2251 = vadd.f32 %v1503, %v2250
      %2252 = vmatmul.f32.gmra.mxu0 %v1849
      %v2253 = vpop.f32.mrf.mxu0
      %v2254 = vadd.f32 %v1503, %v2253
      %2255 = vmatmul.f32.gmra.mxu0 %v1852
      %v2256 = vpop.f32.mrf.mxu0
      %v2257 = vadd.f32 %v1503, %v2256
      %2258 = vmatmul.f32.gmra.mxu0 %v1855
      %v2259 = vpop.f32.mrf.mxu0
      %v2260 = vadd.f32 %v1503, %v2259
      %2261 = vmatmul.f32.gmra.mxu0 %v1858
      %v2262 = vpop.f32.mrf.mxu0
      %v2263 = vadd.f32 %v1503, %v2262
      %2264 = vmatmul.f32.gmra.mxu0 %v1861
      %v2265 = vpop.f32.mrf.mxu0
      %v2266 = vadd.f32 %v1503, %v2265
      %2267 = vmatmul.f32.gmra.mxu0 %v1864
      %v2268 = vpop.f32.mrf.mxu0
      %v2269 = vadd.f32 %v1503, %v2268
      %2270 = vmatmul.f32.gmra.mxu0 %v1867
      %v2271 = vpop.f32.mrf.mxu0
      %v2272 = vadd.f32 %v1503, %v2271
      %2273 = vmatmul.f32.gmra.mxu0 %v1870
      %v2274 = vpop.f32.mrf.mxu0
      %v2275 = vadd.f32 %v1503, %v2274
      %2276 = vmatmul.f32.gmra.mxu0 %v1873
      %v2277 = vpop.f32.mrf.mxu0
      %v2278 = vadd.f32 %v1503, %v2277
      %2279 = vmatmul.f32.gmra.mxu0 %v1876
      %v2280 = vpop.f32.mrf.mxu0
      %v2281 = vadd.f32 %v1503, %v2280
      %2282 = vmatmul.f32.gmra.mxu0 %v1879
      %v2283 = vpop.f32.mrf.mxu0
      %v2284 = vadd.f32 %v1503, %v2283
      %2285 = vmatmul.f32.gmra.mxu0 %v1882
      %v2286 = vpop.f32.mrf.mxu0
      %v2287 = vadd.f32 %v1503, %v2286
      %2288 = vmatmul.f32.gmra.mxu0 %v1885
      %v2289 = vpop.f32.mrf.mxu0
      %v2290 = vadd.f32 %v1503, %v2289
      %2291 = vmatmul.f32.gmra.mxu0 %v1888
      %v2292 = vpop.f32.mrf.mxu0
      %v2293 = vadd.f32 %v1503, %v2292
      %2294 = vdwg.mxu0
      %vm2295 = vcmask 392192
      %2296 = vst.msk [vmem:[%s316] sm:$0xff] %vm2295, %v1912
      %2297 = vst.msk [vmem:[%s316 + $0x8] sm:$0xff] %vm2295, %v1915
      %2298 = vst.msk [vmem:[%s316 + $0x10] sm:$0xff] %vm2295, %v1918
      %2299 = vst.msk [vmem:[%s316 + $0x18] sm:$0xff] %vm2295, %v1921
      %2300 = vst.msk [vmem:[%s316 + $0x20] sm:$0xff] %vm2295, %v1924
      %2301 = vst.msk [vmem:[%s316 + $0x28] sm:$0xff] %vm2295, %v1927
      %2302 = vst.msk [vmem:[%s316 + $0x30] sm:$0xff] %vm2295, %v1930
      %2303 = vst.msk [vmem:[%s316 + $0x38] sm:$0xff] %vm2295, %v1933
      %2304 = vst.msk [vmem:[%s316 + $0x40] sm:$0xff] %vm2295, %v1936
      %2305 = vst.msk [vmem:[%s316 + $0x48] sm:$0xff] %vm2295, %v1939
      %2306 = vst.msk [vmem:[%s316 + $0x50] sm:$0xff] %vm2295, %v1942
      %2307 = vst.msk [vmem:[%s316 + $0x58] sm:$0xff] %vm2295, %v1945
      %2308 = vst.msk [vmem:[%s316 + $0x60] sm:$0xff] %vm2295, %v1948
      %2309 = vst.msk [vmem:[%s316 + $0x68] sm:$0xff] %vm2295, %v1951
      %2310 = vst.msk [vmem:[%s316 + $0x70] sm:$0xff] %vm2295, %v1954
      %2311 = vst.msk [vmem:[%s316 + $0x78] sm:$0xff] %vm2295, %v1957
      %2312 = vst.msk [vmem:[%s316 + $0x80] sm:$0xff] %vm2295, %v1960
      %2313 = vst.msk [vmem:[%s316 + $0x88] sm:$0xff] %vm2295, %v1963
      %2314 = vst.msk [vmem:[%s316 + $0x90] sm:$0xff] %vm2295, %v1966
      %2315 = vst.msk [vmem:[%s316 + $0x98] sm:$0xff] %vm2295, %v1969
      %2316 = vst.msk [vmem:[%s316 + $0xa0] sm:$0xff] %vm2295, %v1972
      %2317 = vst.msk [vmem:[%s316 + $0xa8] sm:$0xff] %vm2295, %v1975
      %2318 = vst.msk [vmem:[%s316 + $0xb0] sm:$0xff] %vm2295, %v1978
      %2319 = vst.msk [vmem:[%s316 + $0xb8] sm:$0xff] %vm2295, %v1981
      %2320 = vst.msk [vmem:[%s316 + $0xc0] sm:$0xff] %vm2295, %v1984
      %2321 = vst.msk [vmem:[%s316 + $0xc8] sm:$0xff] %vm2295, %v1987
      %2322 = vst.msk [vmem:[%s316 + $0xd0] sm:$0xff] %vm2295, %v1990
      %2323 = vst.msk [vmem:[%s316 + $0xd8] sm:$0xff] %vm2295, %v1993
      %2324 = vst.msk [vmem:[%s316 + $0xe0] sm:$0xff] %vm2295, %v1996
      %2325 = vst.msk [vmem:[%s316 + $0xe8] sm:$0xff] %vm2295, %v1999
      %2326 = vst.msk [vmem:[%s316 + $0xf0] sm:$0xff] %vm2295, %v2002
      %2327 = vst.msk [vmem:[%s316 + $0xf8] sm:$0xff] %vm2295, %v2005
      %2328 = vst.msk [vmem:[%s316 + $0x100] sm:$0xff] %vm2295, %v2008
      %2329 = vst.msk [vmem:[%s316 + $0x108] sm:$0xff] %vm2295, %v2011
      %2330 = vst.msk [vmem:[%s316 + $0x110] sm:$0xff] %vm2295, %v2014
      %2331 = vst.msk [vmem:[%s316 + $0x118] sm:$0xff] %vm2295, %v2017
      %2332 = vst.msk [vmem:[%s316 + $0x120] sm:$0xff] %vm2295, %v2020
      %2333 = vst.msk [vmem:[%s316 + $0x128] sm:$0xff] %vm2295, %v2023
      %2334 = vst.msk [vmem:[%s316 + $0x130] sm:$0xff] %vm2295, %v2026
      %2335 = vst.msk [vmem:[%s316 + $0x138] sm:$0xff] %vm2295, %v2029
      %2336 = vst.msk [vmem:[%s316 + $0x140] sm:$0xff] %vm2295, %v2032
      %2337 = vst.msk [vmem:[%s316 + $0x148] sm:$0xff] %vm2295, %v2035
      %2338 = vst.msk [vmem:[%s316 + $0x150] sm:$0xff] %vm2295, %v2038
      %2339 = vst.msk [vmem:[%s316 + $0x158] sm:$0xff] %vm2295, %v2041
      %2340 = vst.msk [vmem:[%s316 + $0x160] sm:$0xff] %vm2295, %v2044
      %2341 = vst.msk [vmem:[%s316 + $0x168] sm:$0xff] %vm2295, %v2047
      %2342 = vst.msk [vmem:[%s316 + $0x170] sm:$0xff] %vm2295, %v2050
      %2343 = vst.msk [vmem:[%s316 + $0x178] sm:$0xff] %vm2295, %v2053
      %2344 = vst.msk [vmem:[%s316 + $0x180] sm:$0xff] %vm2295, %v2056
      %2345 = vst.msk [vmem:[%s316 + $0x188] sm:$0xff] %vm2295, %v2059
      %2346 = vst.msk [vmem:[%s316 + $0x190] sm:$0xff] %vm2295, %v2062
      %2347 = vst.msk [vmem:[%s316 + $0x198] sm:$0xff] %vm2295, %v2065
      %2348 = vst.msk [vmem:[%s316 + $0x1a0] sm:$0xff] %vm2295, %v2068
      %2349 = vst.msk [vmem:[%s316 + $0x1a8] sm:$0xff] %vm2295, %v2071
      %2350 = vst.msk [vmem:[%s316 + $0x1b0] sm:$0xff] %vm2295, %v2074
      %2351 = vst.msk [vmem:[%s316 + $0x1b8] sm:$0xff] %vm2295, %v2077
      %2352 = vst.msk [vmem:[%s316 + $0x1c0] sm:$0xff] %vm2295, %v2080
      %2353 = vst.msk [vmem:[%s316 + $0x1c8] sm:$0xff] %vm2295, %v2083
      %2354 = vst.msk [vmem:[%s316 + $0x1d0] sm:$0xff] %vm2295, %v2086
      %2355 = vst.msk [vmem:[%s316 + $0x1d8] sm:$0xff] %vm2295, %v2089
      %2356 = vst.msk [vmem:[%s316 + $0x1e0] sm:$0xff] %vm2295, %v2092
      %2357 = vst.msk [vmem:[%s316 + $0x1e8] sm:$0xff] %vm2295, %v2095
      %2358 = vst.msk [vmem:[%s316 + $0x1f0] sm:$0xff] %vm2295, %v2098
      %2359 = vst.msk [vmem:[%s316 + $0x1f8] sm:$0xff] %vm2295, %v2101
      %2360 = vst.msk [vmem:[%s316 + $0x200] sm:$0xff] %vm2295, %v2104
      %2361 = vst.msk [vmem:[%s316 + $0x208] sm:$0xff] %vm2295, %v2107
      %2362 = vst.msk [vmem:[%s316 + $0x210] sm:$0xff] %vm2295, %v2110
      %2363 = vst.msk [vmem:[%s316 + $0x218] sm:$0xff] %vm2295, %v2113
      %2364 = vst.msk [vmem:[%s316 + $0x220] sm:$0xff] %vm2295, %v2116
      %2365 = vst.msk [vmem:[%s316 + $0x228] sm:$0xff] %vm2295, %v2119
      %2366 = vst.msk [vmem:[%s316 + $0x230] sm:$0xff] %vm2295, %v2122
      %2367 = vst.msk [vmem:[%s316 + $0x238] sm:$0xff] %vm2295, %v2125
      %2368 = vst.msk [vmem:[%s316 + $0x240] sm:$0xff] %vm2295, %v2128
      %2369 = vst.msk [vmem:[%s316 + $0x248] sm:$0xff] %vm2295, %v2131
      %2370 = vst.msk [vmem:[%s316 + $0x250] sm:$0xff] %vm2295, %v2134
      %2371 = vst.msk [vmem:[%s316 + $0x258] sm:$0xff] %vm2295, %v2137
      %2372 = vst.msk [vmem:[%s316 + $0x260] sm:$0xff] %vm2295, %v2140
      %2373 = vst.msk [vmem:[%s316 + $0x268] sm:$0xff] %vm2295, %v2143
      %2374 = vst.msk [vmem:[%s316 + $0x270] sm:$0xff] %vm2295, %v2146
      %2375 = vst.msk [vmem:[%s316 + $0x278] sm:$0xff] %vm2295, %v2149
      %2376 = vst.msk [vmem:[%s316 + $0x280] sm:$0xff] %vm2295, %v2152
      %2377 = vst.msk [vmem:[%s316 + $0x288] sm:$0xff] %vm2295, %v2155
      %2378 = vst.msk [vmem:[%s316 + $0x290] sm:$0xff] %vm2295, %v2158
      %2379 = vst.msk [vmem:[%s316 + $0x298] sm:$0xff] %vm2295, %v2161
      %2380 = vst.msk [vmem:[%s316 + $0x2a0] sm:$0xff] %vm2295, %v2164
      %2381 = vst.msk [vmem:[%s316 + $0x2a8] sm:$0xff] %vm2295, %v2167
      %2382 = vst.msk [vmem:[%s316 + $0x2b0] sm:$0xff] %vm2295, %v2170
      %2383 = vst.msk [vmem:[%s316 + $0x2b8] sm:$0xff] %vm2295, %v2173
      %2384 = vst.msk [vmem:[%s316 + $0x2c0] sm:$0xff] %vm2295, %v2176
      %2385 = vst.msk [vmem:[%s316 + $0x2c8] sm:$0xff] %vm2295, %v2179
      %2386 = vst.msk [vmem:[%s316 + $0x2d0] sm:$0xff] %vm2295, %v2182
      %2387 = vst.msk [vmem:[%s316 + $0x2d8] sm:$0xff] %vm2295, %v2185
      %2388 = vst.msk [vmem:[%s316 + $0x2e0] sm:$0xff] %vm2295, %v2188
      %2389 = vst.msk [vmem:[%s316 + $0x2e8] sm:$0xff] %vm2295, %v2191
      %2390 = vst.msk [vmem:[%s316 + $0x2f0] sm:$0xff] %vm2295, %v2194
      %2391 = vst.msk [vmem:[%s316 + $0x2f8] sm:$0xff] %vm2295, %v2197
      %2392 = vst.msk [vmem:[%s316 + $0x300] sm:$0xff] %vm2295, %v2200
      %2393 = vst.msk [vmem:[%s316 + $0x308] sm:$0xff] %vm2295, %v2203
      %2394 = vst.msk [vmem:[%s316 + $0x310] sm:$0xff] %vm2295, %v2206
      %2395 = vst.msk [vmem:[%s316 + $0x318] sm:$0xff] %vm2295, %v2209
      %2396 = vst.msk [vmem:[%s316 + $0x320] sm:$0xff] %vm2295, %v2212
      %2397 = vst.msk [vmem:[%s316 + $0x328] sm:$0xff] %vm2295, %v2215
      %2398 = vst.msk [vmem:[%s316 + $0x330] sm:$0xff] %vm2295, %v2218
      %2399 = vst.msk [vmem:[%s316 + $0x338] sm:$0xff] %vm2295, %v2221
      %2400 = vst.msk [vmem:[%s316 + $0x340] sm:$0xff] %vm2295, %v2224
      %2401 = vst.msk [vmem:[%s316 + $0x348] sm:$0xff] %vm2295, %v2227
      %2402 = vst.msk [vmem:[%s316 + $0x350] sm:$0xff] %vm2295, %v2230
      %2403 = vst.msk [vmem:[%s316 + $0x358] sm:$0xff] %vm2295, %v2233
      %2404 = vst.msk [vmem:[%s316 + $0x360] sm:$0xff] %vm2295, %v2236
      %2405 = vst.msk [vmem:[%s316 + $0x368] sm:$0xff] %vm2295, %v2239
      %2406 = vst.msk [vmem:[%s316 + $0x370] sm:$0xff] %vm2295, %v2242
      %2407 = vst.msk [vmem:[%s316 + $0x378] sm:$0xff] %vm2295, %v2245
      %2408 = vst.msk [vmem:[%s316 + $0x380] sm:$0xff] %vm2295, %v2248
      %2409 = vst.msk [vmem:[%s316 + $0x388] sm:$0xff] %vm2295, %v2251
      %2410 = vst.msk [vmem:[%s316 + $0x390] sm:$0xff] %vm2295, %v2254
      %2411 = vst.msk [vmem:[%s316 + $0x398] sm:$0xff] %vm2295, %v2257
      %2412 = vst.msk [vmem:[%s316 + $0x3a0] sm:$0xff] %vm2295, %v2260
      %2413 = vst.msk [vmem:[%s316 + $0x3a8] sm:$0xff] %vm2295, %v2263
      %2414 = vst.msk [vmem:[%s316 + $0x3b0] sm:$0xff] %vm2295, %v2266
      %2415 = vst.msk [vmem:[%s316 + $0x3b8] sm:$0xff] %vm2295, %v2269
      %2416 = vst.msk [vmem:[%s316 + $0x3c0] sm:$0xff] %vm2295, %v2272
      %2417 = vst.msk [vmem:[%s316 + $0x3c8] sm:$0xff] %vm2295, %v2275
      %2418 = vst.msk [vmem:[%s316 + $0x3d0] sm:$0xff] %vm2295, %v2278
      %2419 = vst.msk [vmem:[%s316 + $0x3d8] sm:$0xff] %vm2295, %v2281
      %2420 = vst.msk [vmem:[%s316 + $0x3e0] sm:$0xff] %vm2295, %v2284
      %2421 = vst.msk [vmem:[%s316 + $0x3e8] sm:$0xff] %vm2295, %v2287
      %2422 = vst.msk [vmem:[%s316 + $0x3f0] sm:$0xff] %vm2295, %v2290
      %2423 = vst.msk [vmem:[%s316 + $0x3f8] sm:$0xff] %vm2295, %v2293
      %s2424 = smul.u32 128, %s19
      %p2425 = scmp.lt.s32.totalorder %s2424, 255
      %s2426 = scalar_select %p2425, %s2424, 255
      %s2427 = smul.addr %s2426, 8
      %s2428 = scalar_lea.vmem %s6, %s2427
      %s2429 = smul.u32 128, %s19
      %p2430 = scmp.lt.s32.totalorder %s2429, 255
      %s2431 = scalar_select %p2430, %s2429, 255
      %s2432 = smul.addr %s2431, 8
      %s2433 = scalar_lea.vmem %s7, %s2432
      // Predicated region
      $region45: #{atom_embedding.1} parent=43 // pred_check
        %p2434 = pneg %p173
      $region46: #{atom_embedding.1} parent=43 // pred_check_branch
        %2436 = sbr.rel (%p2434) target = $region48
      $region47: #{atom_embedding.1} parent=43 // pred_region
        %s2437 = smul.u32 128, %s19
      $region48: #{atom_embedding.1} parent=43 // pred_fallthru
        _
      // Predicated region
      $region49: #{atom_embedding.1} parent=43 // pred_check
        %p2438 = pneg %p199
      $region50: #{atom_embedding.1} parent=43 // pred_check_branch
        %2440 = sbr.rel (%p2438) target = $region52
      $region51: #{atom_embedding.1} parent=43 // pred_region
        %s2441 = smul.u32 128, %s19
      $region52: #{atom_embedding.1} parent=43 // pred_fallthru
        _
    $region44: #{atom_embedding.1} parent=5 // pred_fallthru
      _
    %p2442 = scmp.le.s32.totalorder 2, %s14
    // Predicated region
    $region53: #{atom_embedding.1} parent=5 // pred_check
      %p2443 = pneg %p2442
    $region54: #{atom_embedding.1} parent=5 // pred_check_branch
      %2445 = sbr.rel (%p2443) target = $region56
    $region55: #{atom_embedding.1} parent=5 // pred_region
      %s2446 = ssub.s32 %s14, 2
      // Predicated region
      $region57: #{atom_embedding.1} parent=55 // pred_check
        %p2447 = pneg %p179
      $region58: #{atom_embedding.1} parent=55 // pred_check_branch
        %2449 = sbr.rel (%p2447) target = $region60
      $region59: #{atom_embedding.1} parent=55 // pred_region
        %s2450 = smul.u32 128, %s20
        %p2451 = scmp.lt.s32.totalorder %s2450, 255
        %s2452 = scalar_select %p2451, %s2450, 255
        %s2453 = smul.addr %s2452, 8
        %s2454 = scalar_lea.vmem %s6, %s2453
      $region60: #{atom_embedding.1} parent=55 // pred_fallthru
        _
      // Predicated region
      $region61: #{atom_embedding.1} parent=55 // pred_check
        %p2455 = pneg %p205
      $region62: #{atom_embedding.1} parent=55 // pred_check_branch
        %2457 = sbr.rel (%p2455) target = $region64
      $region63: #{atom_embedding.1} parent=55 // pred_region
        %s2458 = smul.u32 128, %s20
        %p2459 = scmp.lt.s32.totalorder %s2458, 255
        %s2460 = scalar_select %p2459, %s2458, 255
        %s2461 = smul.addr %s2460, 8
        %s2462 = scalar_lea.vmem %s7, %s2461
      $region64: #{atom_embedding.1} parent=55 // pred_fallthru
        _
    $region56: #{atom_embedding.1} parent=5 // pred_fallthru
      _
  $region6: #{atom_embedding.1} parent=0 // loop_footer
    %s18 = sadd.s32 1, %s14
  $region7: #{atom_embedding.1} parent=0 // loop_footer_branch
    %13 = sbr.rel target = $region3
  $region8: #{atom_embedding.1} parent=0 // loop_exit
    _

</llo_original>
